<compile_context>
chip_gen: v5e
topology: v5e:2x2
jax: 0.10.0
libtpu: 0.0.40
codegen_flags: <defaults>
</compile_context>

<pallas_src>
import math
import functools

import jax
import jax.numpy as jnp
from jax import lax
from jax.experimental import pallas as pl
from jax.experimental.pallas import tpu as pltpu


def _round_up(x, m):
    return (x + m - 1) // m * m


def _vmem_capacity_bytes():
    try:
        info = pltpu.get_tpu_info()
        cap = getattr(info, "vmem_capacity_bytes", None)
        if cap:
            return int(cap)
    except Exception:
        pass
    return 64 * 1024 * 1024          # conservative (v7x-sized) fallback


def _num_tensorcores():
    try:
        info = pltpu.get_tpu_info()
        for name in ("num_cores", "tensor_core_count", "num_tensorcores", "core_count"):
            n = getattr(info, name, None)
            if n:
                return int(n)
    except Exception:
        pass
    try:
        n = getattr(jax.devices()[0], "num_cores", None)
        if n:
            return int(n)
    except Exception:
        pass
    return 1


def _select_tiles(bs, seq, HP, xw_itemsize, out_itemsize, u_bytes, vmem_budget, n_tc):
    """VMEM-aware (bs_tile, t_chunk) selection.

    Budget = double-buffered xw input + double-buffered hidden_seq output
             + h_T/c_T blocks + f32 h/c scratch + ONE resident copy of U.
    Batch is split only for megacore occupancy (n_tc tiles) or when VMEM
    forces it; the grid is a sequential loop otherwise.
    """
    def _divisors_desc(n, cap):
        return [d for d in range(min(n, cap), 0, -1) if n % d == 0]

    batch_candidates = []
    if n_tc >= 2 and bs % n_tc == 0:
        part = bs // n_tc
        if part % 8 == 0 or part == bs:
            batch_candidates.append(part)
    if bs not in batch_candidates:
        batch_candidates.append(bs)
    for d in _divisors_desc(bs, bs):
        if d % 8 == 0 and d not in batch_candidates:
            batch_candidates.append(d)

    time_candidates = _divisors_desc(seq, 16)   # cap the in-kernel unroll depth

    for bt in batch_candidates:
        for tc in time_candidates:
            need = (2 * bt * tc * 4 * HP * xw_itemsize     # xw in (double-buffered)
                    + 2 * bt * tc * HP * out_itemsize      # hidden_seq out (double-buffered)
                    + 4 * bt * HP * out_itemsize           # h_T / c_T output blocks
                    + 2 * bt * HP * 4                      # h / c f32 carry scratch
                    + u_bytes)                             # single resident U copy
            if need <= vmem_budget:
                return bt, tc
    return batch_candidates[-1], time_candidates[-1]      # smallest tiles as fallback


def _pad_gate_cols(w, hs, hp):
    """(..., 4*hs) -> (..., 4*hp): each gate slab zero-padded to hp lanes."""
    if hp == hs:
        return w
    pads = [(0, 0)] * (w.ndim - 1) + [(0, hp - hs)]
    parts = [jnp.pad(w[..., k * hs:(k + 1) * hs], pads) for k in range(4)]
    return jnp.concatenate(parts, axis=-1)


def _sigmoid_via_tanh(x):
    # sigmoid(x) == 0.5 * tanh(0.5 * x) + 0.5 : exactly one EUP op per gate.
    return 0.5 * jnp.tanh(0.5 * x) + 0.5


def _lstm_kernel(xw_ref, u_hbm, hseq_ref, hT_ref, cT_ref,
                 u_vmem, h_scr, c_scr, *, hidden_pad, t_chunk, mxu_dtype):
    t = pl.program_id(1)                   # time-chunk index (sequential axis)

    @pl.when(t == 0)
    def _():
        # Single resident copy of U (no pointless double-buffering of a
        # constant-index input); copied once per batch tile.
        pltpu.sync_copy(u_hbm, u_vmem)
        h_scr[...] = jnp.zeros_like(h_scr)
        c_scr[...] = jnp.zeros_like(c_scr)

    HP = hidden_pad
    u = u_vmem[...]                        # (HP, 4*HP), mxu_dtype

    def step(tt, carry):
        h, c = carry
        # Leading-index access: whole (sublane, lane) tiles, no strided relayout.
        gate = xw_ref[tt].astype(jnp.float32) + jnp.dot(
            h.astype(mxu_dtype), u, preferred_element_type=jnp.float32)
        i_t = _sigmoid_via_tanh(gate[:, 0 * HP:1 * HP])
        f_t = _sigmoid_via_tanh(gate[:, 1 * HP:2 * HP])
        g_t = jnp.tanh(gate[:, 2 * HP:3 * HP])
        o_t = _sigmoid_via_tanh(gate[:, 3 * HP:4 * HP])
        c = f_t * c + i_t * g_t
        h = o_t * jnp.tanh(c)
        hseq_ref[tt] = h.astype(hseq_ref.dtype)
        return h, c

    # fori_loop bounds live ranges to the (h, c) carry across timesteps.
    h, c = lax.fori_loop(0, t_chunk, step, (h_scr[...], c_scr[...]), unroll=True)
    h_scr[...] = h
    c_scr[...] = c

    # Written every chunk; their block index is constant over the time axis so
    # only the final state survives (no reliance on last-chunk-only writes).
    hT_ref[...] = h.astype(hT_ref.dtype)
    cT_ref[...] = c.astype(cT_ref.dtype)


def custom_lstm_forward(x, W, U, bias, *, compute_dtype=jnp.bfloat16):
    """x: (batch, seq, input_size) f32.  Returns (hidden_seq, (h_T, c_T))."""
    bs, seq, input_sz = x.shape
    hidden_sz = U.shape[0]
    assert W.shape == (input_sz, 4 * hidden_sz)
    assert U.shape == (hidden_sz, 4 * hidden_sz)
    assert bias.shape == (4 * hidden_sz,)

    HS = hidden_sz
    HP = _round_up(HS, 128)                     # lane-dense per-gate slabs

    mxu_dtype = jnp.dtype(compute_dtype)
    exact = mxu_dtype == jnp.dtype(jnp.float32)
    xw_dtype = jnp.dtype(jnp.float32) if exact else jnp.dtype(jnp.bfloat16)

    # ---- VMEM-aware tiling + explicit VMEM limit ---------------------------
    vmem_cap = _vmem_capacity_bytes()
    vmem_limit = int(vmem_cap * 0.85)
    vmem_budget = int(vmem_limit * 0.75)
    u_bytes = HP * 4 * HP * mxu_dtype.itemsize
    bs_tile, t_chunk = _select_tiles(
        bs, seq, HP,
        xw_itemsize=xw_dtype.itemsize,
        out_itemsize=jnp.dtype(x.dtype).itemsize,
        u_bytes=u_bytes,
        vmem_budget=vmem_budget,
        n_tc=_num_tensorcores())
    n_b = bs // bs_tile
    n_t = seq // t_chunk

    # ---- lane-dense (padded) parameters ------------------------------------
    W_pad = _pad_gate_cols(W, HS, HP)                                   # (in, 4*HP) f32
    b_pad = _pad_gate_cols(bias, HS, HP)                                # (4*HP,)    f32
    U_pad = _pad_gate_cols(jnp.pad(U, ((0, HP - HS), (0, 0))), HS, HP).astype(mxu_dtype)

    # ---- hoist the time-independent x @ W + bias (one big MXU matmul) ------
    # Time-major so the per-timestep kernel access is a leading-index load.
    x_tm = jnp.swapaxes(x, 0, 1)                                        # (seq, bs, in)
    xw = x_tm.reshape(seq * bs, input_sz) @ W_pad + b_pad
    xw = xw.reshape(seq, bs, 4 * HP).astype(xw_dtype)

    kernel = functools.partial(_lstm_kernel, hidden_pad=HP,
                               t_chunk=t_chunk, mxu_dtype=mxu_dtype)

    hseq_p, hT_p, cT_p = pl.pallas_call(
        kernel,
        out_shape=(
            jax.ShapeDtypeStruct((seq, bs, HP), x.dtype),   # hidden_seq (time-major, padded)
            jax.ShapeDtypeStruct((bs, HP), x.dtype),        # h_T
            jax.ShapeDtypeStruct((bs, HP), x.dtype),        # c_T
        ),
        grid_spec=pltpu.PrefetchScalarGridSpec(
            num_scalar_prefetch=0,
            grid=(n_b, n_t),
            in_specs=[
                pl.BlockSpec((t_chunk, bs_tile, 4 * HP), lambda b, t: (t, b, 0)),  # xw
                pl.BlockSpec(memory_space=pl.ANY),          # U: single VMEM copy via sync_copy
            ],
            out_specs=[
                pl.BlockSpec((t_chunk, bs_tile, HP), lambda b, t: (t, b, 0)),      # hidden_seq
                pl.BlockSpec((bs_tile, HP), lambda b, t: (b, 0)),                  # h_T
                pl.BlockSpec((bs_tile, HP), lambda b, t: (b, 0)),                  # c_T
            ],
            scratch_shapes=[
                pltpu.VMEM((HP, 4 * HP), mxu_dtype),        # resident U (single buffer)
                pltpu.VMEM((bs_tile, HP), jnp.float32),     # h carry
                pltpu.VMEM((bs_tile, HP), jnp.float32),     # c carry
            ],
        ),
        compiler_params=pltpu.CompilerParams(
            dimension_semantics=("parallel", "arbitrary"),
            vmem_limit_bytes=vmem_limit,
        ),
    )(xw, U_pad)

    # One fused transpose(+slice) HBM pass back to (batch, seq, hidden); the
    # in-kernel stores stay leading-index / lane-dense.
    hidden_seq = jnp.swapaxes(hseq_p, 0, 1)[:, :, :HS]
    h_T = hT_p[:, :HS]
    c_T = cT_p[:, :HS]
    return hidden_seq, (h_T, c_T)


def _lstm_reference(x, W, U, bias):
    """Pure-JAX reference matching the PyTorch forward exactly."""
    bs, seq, _ = x.shape
    HS = U.shape[0]
    h_t = jnp.zeros((bs, HS), x.dtype)
    c_t = jnp.zeros((bs, HS), x.dtype)
    hs = []
    for t in range(seq):
        gate = x[:, t, :] @ W + h_t @ U + bias
        i_t = jax.nn.sigmoid(gate[:, :HS])
        f_t = jax.nn.sigmoid(gate[:, HS:2 * HS])
        g_t = jnp.tanh(gate[:, 2 * HS:3 * HS])
        o_t = jax.nn.sigmoid(gate[:, 3 * HS:])
        c_t = f_t * c_t + i_t * g_t
        h_t = o_t * jnp.tanh(c_t)
        hs.append(h_t)
    return jnp.stack(hs, axis=1), (h_t, c_t)


if __name__ == "__main__":
    # Small shapes consistent with the module: (batch, seq, input_size)
    batch, seq, input_sz, hidden_sz = 2, 8, 16, 32

    key = jax.random.PRNGKey(0)
    kx, kw, ku, kb = jax.random.split(key, 4)

    stdv = 1.0 / math.sqrt(hidden_sz)
    W = jax.random.uniform(kw, (input_sz, 4 * hidden_sz), jnp.float32, -stdv, stdv)
    U = jax.random.uniform(ku, (hidden_sz, 4 * hidden_sz), jnp.float32, -stdv, stdv)
    bias = jax.random.uniform(kb, (4 * hidden_sz,), jnp.float32, -stdv, stdv)
    x = jax.random.normal(kx, (batch, seq, input_sz), jnp.float32)

    ref_seq, (ref_h, ref_c) = _lstm_reference(x, W, U, bias)

    # Exact path (f32 MXU operands): must match the f32 reference tightly.
    fwd_f32 = jax.jit(functools.partial(custom_lstm_forward, compute_dtype=jnp.float32))
    hs32, (h32, c32) = jax.block_until_ready(fwd_f32(x, W, U, bias))
    assert hs32.shape == (batch, seq, hidden_sz)
    assert h32.shape == (batch, hidden_sz) and c32.shape == (batch, hidden_sz)
    assert jnp.allclose(hs32, ref_seq, atol=1e-5, rtol=1e-5)
    assert jnp.allclose(h32, ref_h, atol=1e-5, rtol=1e-5)
    assert jnp.allclose(c32, ref_c, atol=1e-5, rtol=1e-5)

    # Default perf path (bf16 MXU operands + bf16 xw stream, f32 accumulation).
    fwd_bf16 = jax.jit(custom_lstm_forward)
    hsb, (hb, cb) = jax.block_until_ready(fwd_bf16(x, W, U, bias))
    assert jnp.allclose(hsb, ref_seq, atol=3e-2, rtol=3e-2)
    assert jnp.allclose(hb, ref_h, atol=3e-2, rtol=3e-2)
    assert jnp.allclose(cb, ref_c, atol=3e-2, rtol=3e-2)

    print("KERNEL_OK")
</pallas_src>

<mosaic_0001>
module attributes {stable_mosaic.version = 11 : i64} {
  func.func @_lstm_kernel(%arg0: i32, %arg1: i32, %arg2: memref<8x2x512xf32, #tpu.memory_space<vmem>>, %arg3: memref<128x512xf32, #tpu.memory_space<any>>, %arg4: memref<8x2x128xf32, #tpu.memory_space<vmem>>, %arg5: memref<2x128xf32, #tpu.memory_space<vmem>>, %arg6: memref<2x128xf32, #tpu.memory_space<vmem>>, %arg7: memref<128x512xf32, #tpu.memory_space<vmem>>, %arg8: memref<2x128xf32, #tpu.memory_space<vmem>>, %arg9: memref<2x128xf32, #tpu.memory_space<vmem>>) attributes {dimension_semantics = [#tpu.dimension_semantics<parallel>, #tpu.dimension_semantics<arbitrary>], iteration_bounds = array<i64: 1, 1>, scalar_prefetch = 0 : i64, scratch_operands = 3 : i64, tpu.core_type = #tpu.core_type<tc>, window_params = [{transform_indices = @transform_0, window_bounds = array<i64: 8, 2, 512>}, {}, {transform_indices = @transform_2, window_bounds = array<i64: 8, 2, 128>}, {transform_indices = @transform_3, window_bounds = array<i64: 2, 128>}, {transform_indices = @transform_4, window_bounds = array<i64: 2, 128>}]} {
    %c0_i32 = arith.constant 0 : i32
    %0 = arith.cmpi eq, %arg1, %c0_i32 : i32
    %1 = arith.extui %0 : i1 to i32
    %c0_i32_0 = arith.constant 0 : i32
    %2 = arith.cmpi ne, %1, %c0_i32_0 : i32
    scf.if %2 {
      "tpu.region"() ({
        %334 = tpu.sem_alloc : memref<!tpu.dma_semaphore, #tpu.memory_space<semaphore_mem>>
        tpu.enqueue_dma source(%arg3 : memref<128x512xf32, #tpu.memory_space<any>>) target(%arg7 : memref<128x512xf32, #tpu.memory_space<vmem>>) target_semaphore(%334 : memref<!tpu.dma_semaphore, #tpu.memory_space<semaphore_mem>>)
        tpu.wait_dma2 semaphore(%334 : memref<!tpu.dma_semaphore, #tpu.memory_space<semaphore_mem>>) src(%arg3 : memref<128x512xf32, #tpu.memory_space<any>>) dst(%arg7 : memref<128x512xf32, #tpu.memory_space<vmem>>)
        tpu.yield
      }) : () -> ()
      %cst_126 = arith.constant 0.000000e+00 : f32
      %330 = vector.broadcast %cst_126 : f32 to vector<2x128xf32>
      %c0_127 = arith.constant 0 : index
      %c0_128 = arith.constant 0 : index
      %331 = vector.load %arg8[%c0_127, %c0_128] : memref<2x128xf32, #tpu.memory_space<vmem>>, vector<2x128xf32>
      tpu.vector_store %arg8[%c0_127, %c0_128], %330 {strides = array<i32>} : memref<2x128xf32, #tpu.memory_space<vmem>>, vector<2x128xf32>,
      %cst_129 = arith.constant 0.000000e+00 : f32
      %332 = vector.broadcast %cst_129 : f32 to vector<2x128xf32>
      %c0_130 = arith.constant 0 : index
      %c0_131 = arith.constant 0 : index
      %333 = vector.load %arg9[%c0_130, %c0_131] : memref<2x128xf32, #tpu.memory_space<vmem>>, vector<2x128xf32>
      tpu.vector_store %arg9[%c0_130, %c0_131], %332 {strides = array<i32>} : memref<2x128xf32, #tpu.memory_space<vmem>>, vector<2x128xf32>,
    } else {
    }
    %c0 = arith.constant 0 : index
    %c0_1 = arith.constant 0 : index
    %3 = vector.load %arg7[%c0, %c0_1] : memref<128x512xf32, #tpu.memory_space<vmem>>, vector<128x512xf32>
    %c0_2 = arith.constant 0 : index
    %c0_3 = arith.constant 0 : index
    %4 = vector.load %arg8[%c0_2, %c0_3] : memref<2x128xf32, #tpu.memory_space<vmem>>, vector<2x128xf32>
    %c0_4 = arith.constant 0 : index
    %c0_5 = arith.constant 0 : index
    %5 = vector.load %arg9[%c0_4, %c0_5] : memref<2x128xf32, #tpu.memory_space<vmem>>, vector<2x128xf32>
    %c0_i32_6 = arith.constant 0 : i32
    %6 = arith.index_cast %c0_i32_6 : i32 to index
    %c0_7 = arith.constant 0 : index
    %c0_8 = arith.constant 0 : index
    %7 = vector.load %arg2[%6, %c0_7, %c0_8] : memref<8x2x512xf32, #tpu.memory_space<vmem>>, vector<1x2x512xf32>
    %8 = vector.shape_cast %7 : vector<1x2x512xf32> to vector<2x512xf32>
    %cst = arith.constant dense<0.000000e+00> : vector<2x512xf32>
    %9 = tpu.matmul %4, %3, %cst {dimension_numbers = #tpu.dot_dimension_numbers<[1], [0], [0], [1], [0, 0, 1, 1], [], []>} : vector<2x128xf32>, vector<128x512xf32>, vector<2x512xf32> -> vector<2x512xf32>
    %10 = arith.addf %8, %9 : vector<2x512xf32>
    %11 = vector.extract_strided_slice %10 {offsets = [0, 0], sizes = [2, 128], strides = [1, 1]} : vector<2x512xf32> to vector<2x128xf32>
    %cst_9 = arith.constant 5.000000e-01 : f32
    %12 = vector.broadcast %cst_9 : f32 to vector<2x128xf32>
    %13 = arith.mulf %12, %11 : vector<2x128xf32>
    %14 = math.tanh %13 : vector<2x128xf32>
    %cst_10 = arith.constant 5.000000e-01 : f32
    %15 = vector.broadcast %cst_10 : f32 to vector<2x128xf32>
    %16 = arith.mulf %15, %14 : vector<2x128xf32>
    %cst_11 = arith.constant 5.000000e-01 : f32
    %17 = vector.broadcast %cst_11 : f32 to vector<2x128xf32>
    %18 = arith.addf %16, %17 : vector<2x128xf32>
    %19 = vector.extract_strided_slice %10 {offsets = [0, 128], sizes = [2, 128], strides = [1, 1]} : vector<2x512xf32> to vector<2x128xf32>
    %cst_12 = arith.constant 5.000000e-01 : f32
    %20 = vector.broadcast %cst_12 : f32 to vector<2x128xf32>
    %21 = arith.mulf %20, %19 : vector<2x128xf32>
    %22 = math.tanh %21 : vector<2x128xf32>
    %cst_13 = arith.constant 5.000000e-01 : f32
    %23 = vector.broadcast %cst_13 : f32 to vector<2x128xf32>
    %24 = arith.mulf %23, %22 : vector<2x128xf32>
    %cst_14 = arith.constant 5.000000e-01 : f32
    %25 = vector.broadcast %cst_14 : f32 to vector<2x128xf32>
    %26 = arith.addf %24, %25 : vector<2x128xf32>
    %27 = vector.extract_strided_slice %10 {offsets = [0, 256], sizes = [2, 128], strides = [1, 1]} : vector<2x512xf32> to vector<2x128xf32>
    %28 = math.tanh %27 : vector<2x128xf32>
    %29 = vector.extract_strided_slice %10 {offsets = [0, 384], sizes = [2, 128], strides = [1, 1]} : vector<2x512xf32> to vector<2x128xf32>
    %cst_15 = arith.constant 5.000000e-01 : f32
    %30 = vector.broadcast %cst_15 : f32 to vector<2x128xf32>
    %31 = arith.mulf %30, %29 : vector<2x128xf32>
    %32 = math.tanh %31 : vector<2x128xf32>
    %cst_16 = arith.constant 5.000000e-01 : f32
    %33 = vector.broadcast %cst_16 : f32 to vector<2x128xf32>
    %34 = arith.mulf %33, %32 : vector<2x128xf32>
    %cst_17 = arith.constant 5.000000e-01 : f32
    %35 = vector.broadcast %cst_17 : f32 to vector<2x128xf32>
    %36 = arith.addf %34, %35 : vector<2x128xf32>
    %37 = arith.mulf %26, %5 : vector<2x128xf32>
    %38 = arith.mulf %18, %28 : vector<2x128xf32>
    %39 = arith.addf %37, %38 : vector<2x128xf32>
    %40 = math.tanh %39 : vector<2x128xf32>
    %41 = arith.mulf %36, %40 : vector<2x128xf32>
    %42 = arith.index_cast %c0_i32_6 : i32 to index
    %c0_18 = arith.constant 0 : index
    %c0_19 = arith.constant 0 : index
    %43 = vector.load %arg4[%42, %c0_18, %c0_19] : memref<8x2x128xf32, #tpu.memory_space<vmem>>, vector<1x2x128xf32>
    %44 = vector.shape_cast %43 : vector<1x2x128xf32> to vector<2x128xf32>
    %45 = vector.shape_cast %41 : vector<2x128xf32> to vector<1x2x128xf32>
    tpu.vector_store %arg4[%42, %c0_18, %c0_19], %45 {strides = array<i32>} : memref<8x2x128xf32, #tpu.memory_space<vmem>>, vector<1x2x128xf32>,
    %c1_i32 = arith.constant 1 : i32
    %46 = arith.index_cast %c1_i32 : i32 to index
    %c0_20 = arith.constant 0 : index
    %c0_21 = arith.constant 0 : index
    %47 = vector.load %arg2[%46, %c0_20, %c0_21] : memref<8x2x512xf32, #tpu.memory_space<vmem>>, vector<1x2x512xf32>
    %48 = vector.shape_cast %47 : vector<1x2x512xf32> to vector<2x512xf32>
    %cst_22 = arith.constant dense<0.000000e+00> : vector<2x512xf32>
    %49 = tpu.matmul %41, %3, %cst_22 {dimension_numbers = #tpu.dot_dimension_numbers<[1], [0], [0], [1], [0, 0, 1, 1], [], []>} : vector<2x128xf32>, vector<128x512xf32>, vector<2x512xf32> -> vector<2x512xf32>
    %50 = arith.addf %48, %49 : vector<2x512xf32>
    %51 = vector.extract_strided_slice %50 {offsets = [0, 0], sizes = [2, 128], strides = [1, 1]} : vector<2x512xf32> to vector<2x128xf32>
    %cst_23 = arith.constant 5.000000e-01 : f32
    %52 = vector.broadcast %cst_23 : f32 to vector<2x128xf32>
    %53 = arith.mulf %52, %51 : vector<2x128xf32>
    %54 = math.tanh %53 : vector<2x128xf32>
    %cst_24 = arith.constant 5.000000e-01 : f32
    %55 = vector.broadcast %cst_24 : f32 to vector<2x128xf32>
    %56 = arith.mulf %55, %54 : vector<2x128xf32>
    %cst_25 = arith.constant 5.000000e-01 : f32
    %57 = vector.broadcast %cst_25 : f32 to vector<2x128xf32>
    %58 = arith.addf %56, %57 : vector<2x128xf32>
    %59 = vector.extract_strided_slice %50 {offsets = [0, 128], sizes = [2, 128], strides = [1, 1]} : vector<2x512xf32> to vector<2x128xf32>
    %cst_26 = arith.constant 5.000000e-01 : f32
    %60 = vector.broadcast %cst_26 : f32 to vector<2x128xf32>
    %61 = arith.mulf %60, %59 : vector<2x128xf32>
    %62 = math.tanh %61 : vector<2x128xf32>
    %cst_27 = arith.constant 5.000000e-01 : f32
    %63 = vector.broadcast %cst_27 : f32 to vector<2x128xf32>
    %64 = arith.mulf %63, %62 : vector<2x128xf32>
    %cst_28 = arith.constant 5.000000e-01 : f32
    %65 = vector.broadcast %cst_28 : f32 to vector<2x128xf32>
    %66 = arith.addf %64, %65 : vector<2x128xf32>
    %67 = vector.extract_strided_slice %50 {offsets = [0, 256], sizes = [2, 128], strides = [1, 1]} : vector<2x512xf32> to vector<2x128xf32>
    %68 = math.tanh %67 : vector<2x128xf32>
    %69 = vector.extract_strided_slice %50 {offsets = [0, 384], sizes = [2, 128], strides = [1, 1]} : vector<2x512xf32> to vector<2x128xf32>
    %cst_29 = arith.constant 5.000000e-01 : f32
    %70 = vector.broadcast %cst_29 : f32 to vector<2x128xf32>
    %71 = arith.mulf %70, %69 : vector<2x128xf32>
    %72 = math.tanh %71 : vector<2x128xf32>
    %cst_30 = arith.constant 5.000000e-01 : f32
    %73 = vector.broadcast %cst_30 : f32 to vector<2x128xf32>
    %74 = arith.mulf %73, %72 : vector<2x128xf32>
    %cst_31 = arith.constant 5.000000e-01 : f32
    %75 = vector.broadcast %cst_31 : f32 to vector<2x128xf32>
    %76 = arith.addf %74, %75 : vector<2x128xf32>
    %77 = arith.mulf %66, %39 : vector<2x128xf32>
    %78 = arith.mulf %58, %68 : vector<2x128xf32>
    %79 = arith.addf %77, %78 : vector<2x128xf32>
    %80 = math.tanh %79 : vector<2x128xf32>
    %81 = arith.mulf %76, %80 : vector<2x128xf32>
    %82 = arith.index_cast %c1_i32 : i32 to index
    %c0_32 = arith.constant 0 : index
    %c0_33 = arith.constant 0 : index
    %83 = vector.load %arg4[%82, %c0_32, %c0_33] : memref<8x2x128xf32, #tpu.memory_space<vmem>>, vector<1x2x128xf32>
    %84 = vector.shape_cast %83 : vector<1x2x128xf32> to vector<2x128xf32>
    %85 = vector.shape_cast %81 : vector<2x128xf32> to vector<1x2x128xf32>
    tpu.vector_store %arg4[%82, %c0_32, %c0_33], %85 {strides = array<i32>} : memref<8x2x128xf32, #tpu.memory_space<vmem>>, vector<1x2x128xf32>,
    %c2_i32 = arith.constant 2 : i32
    %86 = arith.index_cast %c2_i32 : i32 to index
    %c0_34 = arith.constant 0 : index
    %c0_35 = arith.constant 0 : index
    %87 = vector.load %arg2[%86, %c0_34, %c0_35] : memref<8x2x512xf32, #tpu.memory_space<vmem>>, vector<1x2x512xf32>
    %88 = vector.shape_cast %87 : vector<1x2x512xf32> to vector<2x512xf32>
    %cst_36 = arith.constant dense<0.000000e+00> : vector<2x512xf32>
    %89 = tpu.matmul %81, %3, %cst_36 {dimension_numbers = #tpu.dot_dimension_numbers<[1], [0], [0], [1], [0, 0, 1, 1], [], []>} : vector<2x128xf32>, vector<128x512xf32>, vector<2x512xf32> -> vector<2x512xf32>
    %90 = arith.addf %88, %89 : vector<2x512xf32>
    %91 = vector.extract_strided_slice %90 {offsets = [0, 0], sizes = [2, 128], strides = [1, 1]} : vector<2x512xf32> to vector<2x128xf32>
    %cst_37 = arith.constant 5.000000e-01 : f32
    %92 = vector.broadcast %cst_37 : f32 to vector<2x128xf32>
    %93 = arith.mulf %92, %91 : vector<2x128xf32>
    %94 = math.tanh %93 : vector<2x128xf32>
    %cst_38 = arith.constant 5.000000e-01 : f32
    %95 = vector.broadcast %cst_38 : f32 to vector<2x128xf32>
    %96 = arith.mulf %95, %94 : vector<2x128xf32>
    %cst_39 = arith.constant 5.000000e-01 : f32
    %97 = vector.broadcast %cst_39 : f32 to vector<2x128xf32>
    %98 = arith.addf %96, %97 : vector<2x128xf32>
    %99 = vector.extract_strided_slice %90 {offsets = [0, 128], sizes = [2, 128], strides = [1, 1]} : vector<2x512xf32> to vector<2x128xf32>
    %cst_40 = arith.constant 5.000000e-01 : f32
    %100 = vector.broadcast %cst_40 : f32 to vector<2x128xf32>
    %101 = arith.mulf %100, %99 : vector<2x128xf32>
    %102 = math.tanh %101 : vector<2x128xf32>
    %cst_41 = arith.constant 5.000000e-01 : f32
    %103 = vector.broadcast %cst_41 : f32 to vector<2x128xf32>
    %104 = arith.mulf %103, %102 : vector<2x128xf32>
    %cst_42 = arith.constant 5.000000e-01 : f32
    %105 = vector.broadcast %cst_42 : f32 to vector<2x128xf32>
    %106 = arith.addf %104, %105 : vector<2x128xf32>
    %107 = vector.extract_strided_slice %90 {offsets = [0, 256], sizes = [2, 128], strides = [1, 1]} : vector<2x512xf32> to vector<2x128xf32>
    %108 = math.tanh %107 : vector<2x128xf32>
    %109 = vector.extract_strided_slice %90 {offsets = [0, 384], sizes = [2, 128], strides = [1, 1]} : vector<2x512xf32> to vector<2x128xf32>
    %cst_43 = arith.constant 5.000000e-01 : f32
    %110 = vector.broadcast %cst_43 : f32 to vector<2x128xf32>
    %111 = arith.mulf %110, %109 : vector<2x128xf32>
    %112 = math.tanh %111 : vector<2x128xf32>
    %cst_44 = arith.constant 5.000000e-01 : f32
    %113 = vector.broadcast %cst_44 : f32 to vector<2x128xf32>
    %114 = arith.mulf %113, %112 : vector<2x128xf32>
    %cst_45 = arith.constant 5.000000e-01 : f32
    %115 = vector.broadcast %cst_45 : f32 to vector<2x128xf32>
    %116 = arith.addf %114, %115 : vector<2x128xf32>
    %117 = arith.mulf %106, %79 : vector<2x128xf32>
    %118 = arith.mulf %98, %108 : vector<2x128xf32>
    %119 = arith.addf %117, %118 : vector<2x128xf32>
    %120 = math.tanh %119 : vector<2x128xf32>
    %121 = arith.mulf %116, %120 : vector<2x128xf32>
    %122 = arith.index_cast %c2_i32 : i32 to index
    %c0_46 = arith.constant 0 : index
    %c0_47 = arith.constant 0 : index
    %123 = vector.load %arg4[%122, %c0_46, %c0_47] : memref<8x2x128xf32, #tpu.memory_space<vmem>>, vector<1x2x128xf32>
    %124 = vector.shape_cast %123 : vector<1x2x128xf32> to vector<2x128xf32>
    %125 = vector.shape_cast %121 : vector<2x128xf32> to vector<1x2x128xf32>
    tpu.vector_store %arg4[%122, %c0_46, %c0_47], %125 {strides = array<i32>} : memref<8x2x128xf32, #tpu.memory_space<vmem>>, vector<1x2x128xf32>,
    %c3_i32 = arith.constant 3 : i32
    %126 = arith.index_cast %c3_i32 : i32 to index
    %c0_48 = arith.constant 0 : index
    %c0_49 = arith.constant 0 : index
    %127 = vector.load %arg2[%126, %c0_48, %c0_49] : memref<8x2x512xf32, #tpu.memory_space<vmem>>, vector<1x2x512xf32>
    %128 = vector.shape_cast %127 : vector<1x2x512xf32> to vector<2x512xf32>
    %cst_50 = arith.constant dense<0.000000e+00> : vector<2x512xf32>
    %129 = tpu.matmul %121, %3, %cst_50 {dimension_numbers = #tpu.dot_dimension_numbers<[1], [0], [0], [1], [0, 0, 1, 1], [], []>} : vector<2x128xf32>, vector<128x512xf32>, vector<2x512xf32> -> vector<2x512xf32>
    %130 = arith.addf %128, %129 : vector<2x512xf32>
    %131 = vector.extract_strided_slice %130 {offsets = [0, 0], sizes = [2, 128], strides = [1, 1]} : vector<2x512xf32> to vector<2x128xf32>
    %cst_51 = arith.constant 5.000000e-01 : f32
    %132 = vector.broadcast %cst_51 : f32 to vector<2x128xf32>
    %133 = arith.mulf %132, %131 : vector<2x128xf32>
    %134 = math.tanh %133 : vector<2x128xf32>
    %cst_52 = arith.constant 5.000000e-01 : f32
    %135 = vector.broadcast %cst_52 : f32 to vector<2x128xf32>
    %136 = arith.mulf %135, %134 : vector<2x128xf32>
    %cst_53 = arith.constant 5.000000e-01 : f32
    %137 = vector.broadcast %cst_53 : f32 to vector<2x128xf32>
    %138 = arith.addf %136, %137 : vector<2x128xf32>
    %139 = vector.extract_strided_slice %130 {offsets = [0, 128], sizes = [2, 128], strides = [1, 1]} : vector<2x512xf32> to vector<2x128xf32>
    %cst_54 = arith.constant 5.000000e-01 : f32
    %140 = vector.broadcast %cst_54 : f32 to vector<2x128xf32>
    %141 = arith.mulf %140, %139 : vector<2x128xf32>
    %142 = math.tanh %141 : vector<2x128xf32>
    %cst_55 = arith.constant 5.000000e-01 : f32
    %143 = vector.broadcast %cst_55 : f32 to vector<2x128xf32>
    %144 = arith.mulf %143, %142 : vector<2x128xf32>
    %cst_56 = arith.constant 5.000000e-01 : f32
    %145 = vector.broadcast %cst_56 : f32 to vector<2x128xf32>
    %146 = arith.addf %144, %145 : vector<2x128xf32>
    %147 = vector.extract_strided_slice %130 {offsets = [0, 256], sizes = [2, 128], strides = [1, 1]} : vector<2x512xf32> to vector<2x128xf32>
    %148 = math.tanh %147 : vector<2x128xf32>
    %149 = vector.extract_strided_slice %130 {offsets = [0, 384], sizes = [2, 128], strides = [1, 1]} : vector<2x512xf32> to vector<2x128xf32>
    %cst_57 = arith.constant 5.000000e-01 : f32
    %150 = vector.broadcast %cst_57 : f32 to vector<2x128xf32>
    %151 = arith.mulf %150, %149 : vector<2x128xf32>
    %152 = math.tanh %151 : vector<2x128xf32>
    %cst_58 = arith.constant 5.000000e-01 : f32
    %153 = vector.broadcast %cst_58 : f32 to vector<2x128xf32>
    %154 = arith.mulf %153, %152 : vector<2x128xf32>
    %cst_59 = arith.constant 5.000000e-01 : f32
    %155 = vector.broadcast %cst_59 : f32 to vector<2x128xf32>
    %156 = arith.addf %154, %155 : vector<2x128xf32>
    %157 = arith.mulf %146, %119 : vector<2x128xf32>
    %158 = arith.mulf %138, %148 : vector<2x128xf32>
    %159 = arith.addf %157, %158 : vector<2x128xf32>
    %160 = math.tanh %159 : vector<2x128xf32>
    %161 = arith.mulf %156, %160 : vector<2x128xf32>
    %162 = arith.index_cast %c3_i32 : i32 to index
    %c0_60 = arith.constant 0 : index
    %c0_61 = arith.constant 0 : index
    %163 = vector.load %arg4[%162, %c0_60, %c0_61] : memref<8x2x128xf32, #tpu.memory_space<vmem>>, vector<1x2x128xf32>
    %164 = vector.shape_cast %163 : vector<1x2x128xf32> to vector<2x128xf32>
    %165 = vector.shape_cast %161 : vector<2x128xf32> to vector<1x2x128xf32>
    tpu.vector_store %arg4[%162, %c0_60, %c0_61], %165 {strides = array<i32>} : memref<8x2x128xf32, #tpu.memory_space<vmem>>, vector<1x2x128xf32>,
    %c4_i32 = arith.constant 4 : i32
    %166 = arith.index_cast %c4_i32 : i32 to index
    %c0_62 = arith.constant 0 : index
    %c0_63 = arith.constant 0 : index
    %167 = vector.load %arg2[%166, %c0_62, %c0_63] : memref<8x2x512xf32, #tpu.memory_space<vmem>>, vector<1x2x512xf32>
    %168 = vector.shape_cast %167 : vector<1x2x512xf32> to vector<2x512xf32>
    %cst_64 = arith.constant dense<0.000000e+00> : vector<2x512xf32>
    %169 = tpu.matmul %161, %3, %cst_64 {dimension_numbers = #tpu.dot_dimension_numbers<[1], [0], [0], [1], [0, 0, 1, 1], [], []>} : vector<2x128xf32>, vector<128x512xf32>, vector<2x512xf32> -> vector<2x512xf32>
    %170 = arith.addf %168, %169 : vector<2x512xf32>
    %171 = vector.extract_strided_slice %170 {offsets = [0, 0], sizes = [2, 128], strides = [1, 1]} : vector<2x512xf32> to vector<2x128xf32>
    %cst_65 = arith.constant 5.000000e-01 : f32
    %172 = vector.broadcast %cst_65 : f32 to vector<2x128xf32>
    %173 = arith.mulf %172, %171 : vector<2x128xf32>
    %174 = math.tanh %173 : vector<2x128xf32>
    %cst_66 = arith.constant 5.000000e-01 : f32
    %175 = vector.broadcast %cst_66 : f32 to vector<2x128xf32>
    %176 = arith.mulf %175, %174 : vector<2x128xf32>
    %cst_67 = arith.constant 5.000000e-01 : f32
    %177 = vector.broadcast %cst_67 : f32 to vector<2x128xf32>
    %178 = arith.addf %176, %177 : vector<2x128xf32>
    %179 = vector.extract_strided_slice %170 {offsets = [0, 128], sizes = [2, 128], strides = [1, 1]} : vector<2x512xf32> to vector<2x128xf32>
    %cst_68 = arith.constant 5.000000e-01 : f32
    %180 = vector.broadcast %cst_68 : f32 to vector<2x128xf32>
    %181 = arith.mulf %180, %179 : vector<2x128xf32>
    %182 = math.tanh %181 : vector<2x128xf32>
    %cst_69 = arith.constant 5.000000e-01 : f32
    %183 = vector.broadcast %cst_69 : f32 to vector<2x128xf32>
    %184 = arith.mulf %183, %182 : vector<2x128xf32>
    %cst_70 = arith.constant 5.000000e-01 : f32
    %185 = vector.broadcast %cst_70 : f32 to vector<2x128xf32>
    %186 = arith.addf %184, %185 : vector<2x128xf32>
    %187 = vector.extract_strided_slice %170 {offsets = [0, 256], sizes = [2, 128], strides = [1, 1]} : vector<2x512xf32> to vector<2x128xf32>
    %188 = math.tanh %187 : vector<2x128xf32>
    %189 = vector.extract_strided_slice %170 {offsets = [0, 384], sizes = [2, 128], strides = [1, 1]} : vector<2x512xf32> to vector<2x128xf32>
    %cst_71 = arith.constant 5.000000e-01 : f32
    %190 = vector.broadcast %cst_71 : f32 to vector<2x128xf32>
    %191 = arith.mulf %190, %189 : vector<2x128xf32>
    %192 = math.tanh %191 : vector<2x128xf32>
    %cst_72 = arith.constant 5.000000e-01 : f32
    %193 = vector.broadcast %cst_72 : f32 to vector<2x128xf32>
    %194 = arith.mulf %193, %192 : vector<2x128xf32>
    %cst_73 = arith.constant 5.000000e-01 : f32
    %195 = vector.broadcast %cst_73 : f32 to vector<2x128xf32>
    %196 = arith.addf %194, %195 : vector<2x128xf32>
    %197 = arith.mulf %186, %159 : vector<2x128xf32>
    %198 = arith.mulf %178, %188 : vector<2x128xf32>
    %199 = arith.addf %197, %198 : vector<2x128xf32>
    %200 = math.tanh %199 : vector<2x128xf32>
    %201 = arith.mulf %196, %200 : vector<2x128xf32>
    %202 = arith.index_cast %c4_i32 : i32 to index
    %c0_74 = arith.constant 0 : index
    %c0_75 = arith.constant 0 : index
    %203 = vector.load %arg4[%202, %c0_74, %c0_75] : memref<8x2x128xf32, #tpu.memory_space<vmem>>, vector<1x2x128xf32>
    %204 = vector.shape_cast %203 : vector<1x2x128xf32> to vector<2x128xf32>
    %205 = vector.shape_cast %201 : vector<2x128xf32> to vector<1x2x128xf32>
    tpu.vector_store %arg4[%202, %c0_74, %c0_75], %205 {strides = array<i32>} : memref<8x2x128xf32, #tpu.memory_space<vmem>>, vector<1x2x128xf32>,
    %c5_i32 = arith.constant 5 : i32
    %206 = arith.index_cast %c5_i32 : i32 to index
    %c0_76 = arith.constant 0 : index
    %c0_77 = arith.constant 0 : index
    %207 = vector.load %arg2[%206, %c0_76, %c0_77] : memref<8x2x512xf32, #tpu.memory_space<vmem>>, vector<1x2x512xf32>
    %208 = vector.shape_cast %207 : vector<1x2x512xf32> to vector<2x512xf32>
    %cst_78 = arith.constant dense<0.000000e+00> : vector<2x512xf32>
    %209 = tpu.matmul %201, %3, %cst_78 {dimension_numbers = #tpu.dot_dimension_numbers<[1], [0], [0], [1], [0, 0, 1, 1], [], []>} : vector<2x128xf32>, vector<128x512xf32>, vector<2x512xf32> -> vector<2x512xf32>
    %210 = arith.addf %208, %209 : vector<2x512xf32>
    %211 = vector.extract_strided_slice %210 {offsets = [0, 0], sizes = [2, 128], strides = [1, 1]} : vector<2x512xf32> to vector<2x128xf32>
    %cst_79 = arith.constant 5.000000e-01 : f32
    %212 = vector.broadcast %cst_79 : f32 to vector<2x128xf32>
    %213 = arith.mulf %212, %211 : vector<2x128xf32>
    %214 = math.tanh %213 : vector<2x128xf32>
    %cst_80 = arith.constant 5.000000e-01 : f32
    %215 = vector.broadcast %cst_80 : f32 to vector<2x128xf32>
    %216 = arith.mulf %215, %214 : vector<2x128xf32>
    %cst_81 = arith.constant 5.000000e-01 : f32
    %217 = vector.broadcast %cst_81 : f32 to vector<2x128xf32>
    %218 = arith.addf %216, %217 : vector<2x128xf32>
    %219 = vector.extract_strided_slice %210 {offsets = [0, 128], sizes = [2, 128], strides = [1, 1]} : vector<2x512xf32> to vector<2x128xf32>
    %cst_82 = arith.constant 5.000000e-01 : f32
    %220 = vector.broadcast %cst_82 : f32 to vector<2x128xf32>
    %221 = arith.mulf %220, %219 : vector<2x128xf32>
    %222 = math.tanh %221 : vector<2x128xf32>
    %cst_83 = arith.constant 5.000000e-01 : f32
    %223 = vector.broadcast %cst_83 : f32 to vector<2x128xf32>
    %224 = arith.mulf %223, %222 : vector<2x128xf32>
    %cst_84 = arith.constant 5.000000e-01 : f32
    %225 = vector.broadcast %cst_84 : f32 to vector<2x128xf32>
    %226 = arith.addf %224, %225 : vector<2x128xf32>
    %227 = vector.extract_strided_slice %210 {offsets = [0, 256], sizes = [2, 128], strides = [1, 1]} : vector<2x512xf32> to vector<2x128xf32>
    %228 = math.tanh %227 : vector<2x128xf32>
    %229 = vector.extract_strided_slice %210 {offsets = [0, 384], sizes = [2, 128], strides = [1, 1]} : vector<2x512xf32> to vector<2x128xf32>
    %cst_85 = arith.constant 5.000000e-01 : f32
    %230 = vector.broadcast %cst_85 : f32 to vector<2x128xf32>
    %231 = arith.mulf %230, %229 : vector<2x128xf32>
    %232 = math.tanh %231 : vector<2x128xf32>
    %cst_86 = arith.constant 5.000000e-01 : f32
    %233 = vector.broadcast %cst_86 : f32 to vector<2x128xf32>
    %234 = arith.mulf %233, %232 : vector<2x128xf32>
    %cst_87 = arith.constant 5.000000e-01 : f32
    %235 = vector.broadcast %cst_87 : f32 to vector<2x128xf32>
    %236 = arith.addf %234, %235 : vector<2x128xf32>
    %237 = arith.mulf %226, %199 : vector<2x128xf32>
    %238 = arith.mulf %218, %228 : vector<2x128xf32>
    %239 = arith.addf %237, %238 : vector<2x128xf32>
    %240 = math.tanh %239 : vector<2x128xf32>
    %241 = arith.mulf %236, %240 : vector<2x128xf32>
    %242 = arith.index_cast %c5_i32 : i32 to index
    %c0_88 = arith.constant 0 : index
    %c0_89 = arith.constant 0 : index
    %243 = vector.load %arg4[%242, %c0_88, %c0_89] : memref<8x2x128xf32, #tpu.memory_space<vmem>>, vector<1x2x128xf32>
    %244 = vector.shape_cast %243 : vector<1x2x128xf32> to vector<2x128xf32>
    %245 = vector.shape_cast %241 : vector<2x128xf32> to vector<1x2x128xf32>
    tpu.vector_store %arg4[%242, %c0_88, %c0_89], %245 {strides = array<i32>} : memref<8x2x128xf32, #tpu.memory_space<vmem>>, vector<1x2x128xf32>,
    %c6_i32 = arith.constant 6 : i32
    %246 = arith.index_cast %c6_i32 : i32 to index
    %c0_90 = arith.constant 0 : index
    %c0_91 = arith.constant 0 : index
    %247 = vector.load %arg2[%246, %c0_90, %c0_91] : memref<8x2x512xf32, #tpu.memory_space<vmem>>, vector<1x2x512xf32>
    %248 = vector.shape_cast %247 : vector<1x2x512xf32> to vector<2x512xf32>
    %cst_92 = arith.constant dense<0.000000e+00> : vector<2x512xf32>
    %249 = tpu.matmul %241, %3, %cst_92 {dimension_numbers = #tpu.dot_dimension_numbers<[1], [0], [0], [1], [0, 0, 1, 1], [], []>} : vector<2x128xf32>, vector<128x512xf32>, vector<2x512xf32> -> vector<2x512xf32>
    %250 = arith.addf %248, %249 : vector<2x512xf32>
    %251 = vector.extract_strided_slice %250 {offsets = [0, 0], sizes = [2, 128], strides = [1, 1]} : vector<2x512xf32> to vector<2x128xf32>
    %cst_93 = arith.constant 5.000000e-01 : f32
    %252 = vector.broadcast %cst_93 : f32 to vector<2x128xf32>
    %253 = arith.mulf %252, %251 : vector<2x128xf32>
    %254 = math.tanh %253 : vector<2x128xf32>
    %cst_94 = arith.constant 5.000000e-01 : f32
    %255 = vector.broadcast %cst_94 : f32 to vector<2x128xf32>
    %256 = arith.mulf %255, %254 : vector<2x128xf32>
    %cst_95 = arith.constant 5.000000e-01 : f32
    %257 = vector.broadcast %cst_95 : f32 to vector<2x128xf32>
    %258 = arith.addf %256, %257 : vector<2x128xf32>
    %259 = vector.extract_strided_slice %250 {offsets = [0, 128], sizes = [2, 128], strides = [1, 1]} : vector<2x512xf32> to vector<2x128xf32>
    %cst_96 = arith.constant 5.000000e-01 : f32
    %260 = vector.broadcast %cst_96 : f32 to vector<2x128xf32>
    %261 = arith.mulf %260, %259 : vector<2x128xf32>
    %262 = math.tanh %261 : vector<2x128xf32>
    %cst_97 = arith.constant 5.000000e-01 : f32
    %263 = vector.broadcast %cst_97 : f32 to vector<2x128xf32>
    %264 = arith.mulf %263, %262 : vector<2x128xf32>
    %cst_98 = arith.constant 5.000000e-01 : f32
    %265 = vector.broadcast %cst_98 : f32 to vector<2x128xf32>
    %266 = arith.addf %264, %265 : vector<2x128xf32>
    %267 = vector.extract_strided_slice %250 {offsets = [0, 256], sizes = [2, 128], strides = [1, 1]} : vector<2x512xf32> to vector<2x128xf32>
    %268 = math.tanh %267 : vector<2x128xf32>
    %269 = vector.extract_strided_slice %250 {offsets = [0, 384], sizes = [2, 128], strides = [1, 1]} : vector<2x512xf32> to vector<2x128xf32>
    %cst_99 = arith.constant 5.000000e-01 : f32
    %270 = vector.broadcast %cst_99 : f32 to vector<2x128xf32>
    %271 = arith.mulf %270, %269 : vector<2x128xf32>
    %272 = math.tanh %271 : vector<2x128xf32>
    %cst_100 = arith.constant 5.000000e-01 : f32
    %273 = vector.broadcast %cst_100 : f32 to vector<2x128xf32>
    %274 = arith.mulf %273, %272 : vector<2x128xf32>
    %cst_101 = arith.constant 5.000000e-01 : f32
    %275 = vector.broadcast %cst_101 : f32 to vector<2x128xf32>
    %276 = arith.addf %274, %275 : vector<2x128xf32>
    %277 = arith.mulf %266, %239 : vector<2x128xf32>
    %278 = arith.mulf %258, %268 : vector<2x128xf32>
    %279 = arith.addf %277, %278 : vector<2x128xf32>
    %280 = math.tanh %279 : vector<2x128xf32>
    %281 = arith.mulf %276, %280 : vector<2x128xf32>
    %282 = arith.index_cast %c6_i32 : i32 to index
    %c0_102 = arith.constant 0 : index
    %c0_103 = arith.constant 0 : index
    %283 = vector.load %arg4[%282, %c0_102, %c0_103] : memref<8x2x128xf32, #tpu.memory_space<vmem>>, vector<1x2x128xf32>
    %284 = vector.shape_cast %283 : vector<1x2x128xf32> to vector<2x128xf32>
    %285 = vector.shape_cast %281 : vector<2x128xf32> to vector<1x2x128xf32>
    tpu.vector_store %arg4[%282, %c0_102, %c0_103], %285 {strides = array<i32>} : memref<8x2x128xf32, #tpu.memory_space<vmem>>, vector<1x2x128xf32>,
    %c7_i32 = arith.constant 7 : i32
    %286 = arith.index_cast %c7_i32 : i32 to index
    %c0_104 = arith.constant 0 : index
    %c0_105 = arith.constant 0 : index
    %287 = vector.load %arg2[%286, %c0_104, %c0_105] : memref<8x2x512xf32, #tpu.memory_space<vmem>>, vector<1x2x512xf32>
    %288 = vector.shape_cast %287 : vector<1x2x512xf32> to vector<2x512xf32>
    %cst_106 = arith.constant dense<0.000000e+00> : vector<2x512xf32>
    %289 = tpu.matmul %281, %3, %cst_106 {dimension_numbers = #tpu.dot_dimension_numbers<[1], [0], [0], [1], [0, 0, 1, 1], [], []>} : vector<2x128xf32>, vector<128x512xf32>, vector<2x512xf32> -> vector<2x512xf32>
    %290 = arith.addf %288, %289 : vector<2x512xf32>
    %291 = vector.extract_strided_slice %290 {offsets = [0, 0], sizes = [2, 128], strides = [1, 1]} : vector<2x512xf32> to vector<2x128xf32>
    %cst_107 = arith.constant 5.000000e-01 : f32
    %292 = vector.broadcast %cst_107 : f32 to vector<2x128xf32>
    %293 = arith.mulf %292, %291 : vector<2x128xf32>
    %294 = math.tanh %293 : vector<2x128xf32>
    %cst_108 = arith.constant 5.000000e-01 : f32
    %295 = vector.broadcast %cst_108 : f32 to vector<2x128xf32>
    %296 = arith.mulf %295, %294 : vector<2x128xf32>
    %cst_109 = arith.constant 5.000000e-01 : f32
    %297 = vector.broadcast %cst_109 : f32 to vector<2x128xf32>
    %298 = arith.addf %296, %297 : vector<2x128xf32>
    %299 = vector.extract_strided_slice %290 {offsets = [0, 128], sizes = [2, 128], strides = [1, 1]} : vector<2x512xf32> to vector<2x128xf32>
    %cst_110 = arith.constant 5.000000e-01 : f32
    %300 = vector.broadcast %cst_110 : f32 to vector<2x128xf32>
    %301 = arith.mulf %300, %299 : vector<2x128xf32>
    %302 = math.tanh %301 : vector<2x128xf32>
    %cst_111 = arith.constant 5.000000e-01 : f32
    %303 = vector.broadcast %cst_111 : f32 to vector<2x128xf32>
    %304 = arith.mulf %303, %302 : vector<2x128xf32>
    %cst_112 = arith.constant 5.000000e-01 : f32
    %305 = vector.broadcast %cst_112 : f32 to vector<2x128xf32>
    %306 = arith.addf %304, %305 : vector<2x128xf32>
    %307 = vector.extract_strided_slice %290 {offsets = [0, 256], sizes = [2, 128], strides = [1, 1]} : vector<2x512xf32> to vector<2x128xf32>
    %308 = math.tanh %307 : vector<2x128xf32>
    %309 = vector.extract_strided_slice %290 {offsets = [0, 384], sizes = [2, 128], strides = [1, 1]} : vector<2x512xf32> to vector<2x128xf32>
    %cst_113 = arith.constant 5.000000e-01 : f32
    %310 = vector.broadcast %cst_113 : f32 to vector<2x128xf32>
    %311 = arith.mulf %310, %309 : vector<2x128xf32>
    %312 = math.tanh %311 : vector<2x128xf32>
    %cst_114 = arith.constant 5.000000e-01 : f32
    %313 = vector.broadcast %cst_114 : f32 to vector<2x128xf32>
    %314 = arith.mulf %313, %312 : vector<2x128xf32>
    %cst_115 = arith.constant 5.000000e-01 : f32
    %315 = vector.broadcast %cst_115 : f32 to vector<2x128xf32>
    %316 = arith.addf %314, %315 : vector<2x128xf32>
    %317 = arith.mulf %306, %279 : vector<2x128xf32>
    %318 = arith.mulf %298, %308 : vector<2x128xf32>
    %319 = arith.addf %317, %318 : vector<2x128xf32>
    %320 = math.tanh %319 : vector<2x128xf32>
    %321 = arith.mulf %316, %320 : vector<2x128xf32>
    %322 = arith.index_cast %c7_i32 : i32 to index
    %c0_116 = arith.constant 0 : index
    %c0_117 = arith.constant 0 : index
    %323 = vector.load %arg4[%322, %c0_116, %c0_117] : memref<8x2x128xf32, #tpu.memory_space<vmem>>, vector<1x2x128xf32>
    %324 = vector.shape_cast %323 : vector<1x2x128xf32> to vector<2x128xf32>
    %325 = vector.shape_cast %321 : vector<2x128xf32> to vector<1x2x128xf32>
    tpu.vector_store %arg4[%322, %c0_116, %c0_117], %325 {strides = array<i32>} : memref<8x2x128xf32, #tpu.memory_space<vmem>>, vector<1x2x128xf32>,
    %c8_i32 = arith.constant 8 : i32
    %c0_118 = arith.constant 0 : index
    %c0_119 = arith.constant 0 : index
    %326 = vector.load %arg8[%c0_118, %c0_119] : memref<2x128xf32, #tpu.memory_space<vmem>>, vector<2x128xf32>
    tpu.vector_store %arg8[%c0_118, %c0_119], %321 {strides = array<i32>} : memref<2x128xf32, #tpu.memory_space<vmem>>, vector<2x128xf32>,
    %c0_120 = arith.constant 0 : index
    %c0_121 = arith.constant 0 : index
    %327 = vector.load %arg9[%c0_120, %c0_121] : memref<2x128xf32, #tpu.memory_space<vmem>>, vector<2x128xf32>
    tpu.vector_store %arg9[%c0_120, %c0_121], %319 {strides = array<i32>} : memref<2x128xf32, #tpu.memory_space<vmem>>, vector<2x128xf32>,
    %c0_122 = arith.constant 0 : index
    %c0_123 = arith.constant 0 : index
    %328 = vector.load %arg5[%c0_122, %c0_123] : memref<2x128xf32, #tpu.memory_space<vmem>>, vector<2x128xf32>
    tpu.vector_store %arg5[%c0_122, %c0_123], %321 {strides = array<i32>} : memref<2x128xf32, #tpu.memory_space<vmem>>, vector<2x128xf32>,
    %c0_124 = arith.constant 0 : index
    %c0_125 = arith.constant 0 : index
    %329 = vector.load %arg6[%c0_124, %c0_125] : memref<2x128xf32, #tpu.memory_space<vmem>>, vector<2x128xf32>
    tpu.vector_store %arg6[%c0_124, %c0_125], %319 {strides = array<i32>} : memref<2x128xf32, #tpu.memory_space<vmem>>, vector<2x128xf32>,
    return
  }
  func.func @transform_0(%arg0: i32, %arg1: i32) -> (i32, i32, i32) {
    %c0_i32 = arith.constant 0 : i32
    %c0_i32_0 = arith.constant 0 : i32
    return %arg1, %arg0, %c0_i32 : i32, i32, i32
  }
  func.func @transform_2(%arg0: i32, %arg1: i32) -> (i32, i32, i32) {
    %c0_i32 = arith.constant 0 : i32
    %c0_i32_0 = arith.constant 0 : i32
    return %arg1, %arg0, %c0_i32 : i32, i32, i32
  }
  func.func @transform_3(%arg0: i32, %arg1: i32) -> (i32, i32) {
    %c0_i32 = arith.constant 0 : i32
    %c0_i32_0 = arith.constant 0 : i32
    return %arg0, %c0_i32 : i32, i32
  }
  func.func @transform_4(%arg0: i32, %arg1: i32) -> (i32, i32) {
    %c0_i32 = arith.constant 0 : i32
    %c0_i32_0 = arith.constant 0 : i32
    return %arg0, %c0_i32 : i32, i32
  }
}

</mosaic_0001>

<llo_original>
// kernel: custom_lstm_forward.1
$region0: #{custom_lstm_forward.1}
  #allocation0 [shape = 'u32[]', space=smem, size = 0x4, offset = 0x4, fixed_abs, tag = 'smem constant byte address 0x4 - core index']
  #allocation1 [shape = 'u32[72,128]{1,0:T(1,128)}', space=vmem, size = 0x9000, scoped, tag = 'internal scratch']
  #allocation2 [shape = 'f32[128,512]{1,0:T(8,128)}', space=vmem, size = 0x40000, scoped, tag = 'scratch operand']
  #allocation3 [shape = 'f32[2,128]{1,0:T(2,128)}', space=vmem, size = 0x400, scoped, tag = 'scratch operand']
  #allocation4 [shape = 'f32[2,128]{1,0:T(2,128)}', space=vmem, size = 0x400, scoped, tag = 'scratch operand']
  #allocation10 [shape = 's32[]', space=sflag, size = 0x4, offset = 0, fixed_abs, tag = 'sflag constant byte address 0x0 - dummy sync flag']
  %s0 = inlined_call_operand.vmem [shape: f32[8,2,512], index: 0, kind: input, shape index: {}]
  %s1 = inlined_call_operand.vmem [shape: f32[128,512], index: 1, kind: input, shape index: {}]
  %s2 = inlined_call_operand.vmem [shape: f32[8,2,128], index: 2, kind: output, shape index: {0}]
  %s3 = inlined_call_operand.hbm [shape: f32[2,128], index: 3, kind: output, shape index: {1}]
  %s4 = inlined_call_operand.hbm [shape: f32[2,128], index: 4, kind: output, shape index: {2}]
  %5 = xla_tuple %s2, %s3, %s4
  %s6 = sld [smem:[#allocation0]]
  $region54: #{custom_lstm_forward.1} parent=0
    _
  %s8 = ssub.s32 1, %s6
  %s9 = scalar_select 0, %s8, %s6
  $region1: #{custom_lstm_forward.1} parent=0
    #allocation5 [shape = 'u8[1024]{0}', space=vmem, size = 0x400, scoped, tag = 'output window, operand 1, single buffered']
    #allocation6 [shape = 's32[1]{0}', space=sflag, size = 0x4, scoped, tag = 'scoped memory for custom_lstm_forward.1']
    #allocation7 [shape = 'u8[1024]{0}', space=vmem, size = 0x400, scoped, tag = 'output window, operand 2, single buffered']
    #allocation8 [shape = 's32[1]{0}', space=sflag, size = 0x4, scoped, tag = 'scoped memory for custom_lstm_forward.1']
    %10 = vsyncpa [#allocation6], 0
    %11 = vsyncpa [#allocation8], 0
    // Predicated region
    $region2: #{custom_lstm_forward.1} parent=1 // pred_check
      _
    $region3: #{custom_lstm_forward.1} parent=1 // pred_check_branch
      %13 = sbr.rel (0) target = $region5
    $region4: #{custom_lstm_forward.1} parent=1 // pred_region
      _
    $region5: #{custom_lstm_forward.1} parent=1 // pred_fallthru
      _
    %p14 = scmp.eq.s32.totalorder 0, 0
    // Predicated region
    $region6: #{custom_lstm_forward.1} parent=1 // pred_check
      %p15 = pneg %p14
    $region7: #{custom_lstm_forward.1} parent=1 // pred_check_branch
      %17 = sbr.rel (%p15) target = $region9
    $region8: #{custom_lstm_forward.1} parent=1 // pred_region
      $region10: #{custom_lstm_forward.1} parent=8
        #allocation9 [shape = 's32[1]{0}', space=sflag, size = 0x4, scoped, tag = 'scoped memory for custom_lstm_forward.1']
        // Predicated region
        $region11: #{custom_lstm_forward.1} parent=10 // pred_check
          _
        $region12: #{custom_lstm_forward.1} parent=10 // pred_check_branch
          %19 = sbr.rel (0) target = $region14
        $region13: #{custom_lstm_forward.1} parent=10 // pred_region
          loop: start=0, step=1, limit=1
          $region15: #{custom_lstm_forward.1} parent=13 // loop_pre_header
            _
          $region16: #{custom_lstm_forward.1} parent=13 // loop_header
            %s21 = sphi 0, %s25
            %p22 = scmp.ge.s32.totalorder %s21, 1
            %s26 = sphi %s1, %s1
            %s27 = sphi [#allocation2], [#allocation2]
          $region17: #{custom_lstm_forward.1} parent=13 // loop_header_branch
            %24 = sbr.rel (%p22) target = $region21
          $region18: #{custom_lstm_forward.1} parent=13 // loop_body
            %v28 = vld [vmem:[%s26] sm:$0xff]
            %29 = vst [vmem:[%s27] sm:$0xff] %v28
            %v30 = vld [vmem:[%s26 + $0x8] sm:$0xff]
            %31 = vst [vmem:[%s27 + $0x8] sm:$0xff] %v30
            %v32 = vld [vmem:[%s26 + $0x10] sm:$0xff]
            %33 = vst [vmem:[%s27 + $0x10] sm:$0xff] %v32
            %v34 = vld [vmem:[%s26 + $0x18] sm:$0xff]
            %35 = vst [vmem:[%s27 + $0x18] sm:$0xff] %v34
            %v36 = vld [vmem:[%s26 + $0x20] sm:$0xff]
            %37 = vst [vmem:[%s27 + $0x20] sm:$0xff] %v36
            %v38 = vld [vmem:[%s26 + $0x28] sm:$0xff]
            %39 = vst [vmem:[%s27 + $0x28] sm:$0xff] %v38
            %v40 = vld [vmem:[%s26 + $0x30] sm:$0xff]
            %41 = vst [vmem:[%s27 + $0x30] sm:$0xff] %v40
            %v42 = vld [vmem:[%s26 + $0x38] sm:$0xff]
            %43 = vst [vmem:[%s27 + $0x38] sm:$0xff] %v42
            %v44 = vld [vmem:[%s26 + $0x40] sm:$0xff]
            %45 = vst [vmem:[%s27 + $0x40] sm:$0xff] %v44
            %v46 = vld [vmem:[%s26 + $0x48] sm:$0xff]
            %47 = vst [vmem:[%s27 + $0x48] sm:$0xff] %v46
            %v48 = vld [vmem:[%s26 + $0x50] sm:$0xff]
            %49 = vst [vmem:[%s27 + $0x50] sm:$0xff] %v48
            %v50 = vld [vmem:[%s26 + $0x58] sm:$0xff]
            %51 = vst [vmem:[%s27 + $0x58] sm:$0xff] %v50
            %v52 = vld [vmem:[%s26 + $0x60] sm:$0xff]
            %53 = vst [vmem:[%s27 + $0x60] sm:$0xff] %v52
            %v54 = vld [vmem:[%s26 + $0x68] sm:$0xff]
            %55 = vst [vmem:[%s27 + $0x68] sm:$0xff] %v54
            %v56 = vld [vmem:[%s26 + $0x70] sm:$0xff]
            %57 = vst [vmem:[%s27 + $0x70] sm:$0xff] %v56
            %v58 = vld [vmem:[%s26 + $0x78] sm:$0xff]
            %59 = vst [vmem:[%s27 + $0x78] sm:$0xff] %v58
            %v60 = vld [vmem:[%s26 + $0x80] sm:$0xff]
            %61 = vst [vmem:[%s27 + $0x80] sm:$0xff] %v60
            %v62 = vld [vmem:[%s26 + $0x88] sm:$0xff]
            %63 = vst [vmem:[%s27 + $0x88] sm:$0xff] %v62
            %v64 = vld [vmem:[%s26 + $0x90] sm:$0xff]
            %65 = vst [vmem:[%s27 + $0x90] sm:$0xff] %v64
            %v66 = vld [vmem:[%s26 + $0x98] sm:$0xff]
            %67 = vst [vmem:[%s27 + $0x98] sm:$0xff] %v66
            %v68 = vld [vmem:[%s26 + $0xa0] sm:$0xff]
            %69 = vst [vmem:[%s27 + $0xa0] sm:$0xff] %v68
            %v70 = vld [vmem:[%s26 + $0xa8] sm:$0xff]
            %71 = vst [vmem:[%s27 + $0xa8] sm:$0xff] %v70
            %v72 = vld [vmem:[%s26 + $0xb0] sm:$0xff]
            %73 = vst [vmem:[%s27 + $0xb0] sm:$0xff] %v72
            %v74 = vld [vmem:[%s26 + $0xb8] sm:$0xff]
            %75 = vst [vmem:[%s27 + $0xb8] sm:$0xff] %v74
            %v76 = vld [vmem:[%s26 + $0xc0] sm:$0xff]
            %77 = vst [vmem:[%s27 + $0xc0] sm:$0xff] %v76
            %v78 = vld [vmem:[%s26 + $0xc8] sm:$0xff]
            %79 = vst [vmem:[%s27 + $0xc8] sm:$0xff] %v78
            %v80 = vld [vmem:[%s26 + $0xd0] sm:$0xff]
            %81 = vst [vmem:[%s27 + $0xd0] sm:$0xff] %v80
            %v82 = vld [vmem:[%s26 + $0xd8] sm:$0xff]
            %83 = vst [vmem:[%s27 + $0xd8] sm:$0xff] %v82
            %v84 = vld [vmem:[%s26 + $0xe0] sm:$0xff]
            %85 = vst [vmem:[%s27 + $0xe0] sm:$0xff] %v84
            %v86 = vld [vmem:[%s26 + $0xe8] sm:$0xff]
            %87 = vst [vmem:[%s27 + $0xe8] sm:$0xff] %v86
            %v88 = vld [vmem:[%s26 + $0xf0] sm:$0xff]
            %89 = vst [vmem:[%s27 + $0xf0] sm:$0xff] %v88
            %v90 = vld [vmem:[%s26 + $0xf8] sm:$0xff]
            %91 = vst [vmem:[%s27 + $0xf8] sm:$0xff] %v90
            %v92 = vld [vmem:[%s26 + $0x100] sm:$0xff]
            %93 = vst [vmem:[%s27 + $0x100] sm:$0xff] %v92
            %v94 = vld [vmem:[%s26 + $0x108] sm:$0xff]
            %95 = vst [vmem:[%s27 + $0x108] sm:$0xff] %v94
            %v96 = vld [vmem:[%s26 + $0x110] sm:$0xff]
            %97 = vst [vmem:[%s27 + $0x110] sm:$0xff] %v96
            %v98 = vld [vmem:[%s26 + $0x118] sm:$0xff]
            %99 = vst [vmem:[%s27 + $0x118] sm:$0xff] %v98
            %v100 = vld [vmem:[%s26 + $0x120] sm:$0xff]
            %101 = vst [vmem:[%s27 + $0x120] sm:$0xff] %v100
            %v102 = vld [vmem:[%s26 + $0x128] sm:$0xff]
            %103 = vst [vmem:[%s27 + $0x128] sm:$0xff] %v102
            %v104 = vld [vmem:[%s26 + $0x130] sm:$0xff]
            %105 = vst [vmem:[%s27 + $0x130] sm:$0xff] %v104
            %v106 = vld [vmem:[%s26 + $0x138] sm:$0xff]
            %107 = vst [vmem:[%s27 + $0x138] sm:$0xff] %v106
            %v108 = vld [vmem:[%s26 + $0x140] sm:$0xff]
            %109 = vst [vmem:[%s27 + $0x140] sm:$0xff] %v108
            %v110 = vld [vmem:[%s26 + $0x148] sm:$0xff]
            %111 = vst [vmem:[%s27 + $0x148] sm:$0xff] %v110
            %v112 = vld [vmem:[%s26 + $0x150] sm:$0xff]
            %113 = vst [vmem:[%s27 + $0x150] sm:$0xff] %v112
            %v114 = vld [vmem:[%s26 + $0x158] sm:$0xff]
            %115 = vst [vmem:[%s27 + $0x158] sm:$0xff] %v114
            %v116 = vld [vmem:[%s26 + $0x160] sm:$0xff]
            %117 = vst [vmem:[%s27 + $0x160] sm:$0xff] %v116
            %v118 = vld [vmem:[%s26 + $0x168] sm:$0xff]
            %119 = vst [vmem:[%s27 + $0x168] sm:$0xff] %v118
            %v120 = vld [vmem:[%s26 + $0x170] sm:$0xff]
            %121 = vst [vmem:[%s27 + $0x170] sm:$0xff] %v120
            %v122 = vld [vmem:[%s26 + $0x178] sm:$0xff]
            %123 = vst [vmem:[%s27 + $0x178] sm:$0xff] %v122
            %v124 = vld [vmem:[%s26 + $0x180] sm:$0xff]
            %125 = vst [vmem:[%s27 + $0x180] sm:$0xff] %v124
            %v126 = vld [vmem:[%s26 + $0x188] sm:$0xff]
            %127 = vst [vmem:[%s27 + $0x188] sm:$0xff] %v126
            %v128 = vld [vmem:[%s26 + $0x190] sm:$0xff]
            %129 = vst [vmem:[%s27 + $0x190] sm:$0xff] %v128
            %v130 = vld [vmem:[%s26 + $0x198] sm:$0xff]
            %131 = vst [vmem:[%s27 + $0x198] sm:$0xff] %v130
            %v132 = vld [vmem:[%s26 + $0x1a0] sm:$0xff]
            %133 = vst [vmem:[%s27 + $0x1a0] sm:$0xff] %v132
            %v134 = vld [vmem:[%s26 + $0x1a8] sm:$0xff]
            %135 = vst [vmem:[%s27 + $0x1a8] sm:$0xff] %v134
            %v136 = vld [vmem:[%s26 + $0x1b0] sm:$0xff]
            %137 = vst [vmem:[%s27 + $0x1b0] sm:$0xff] %v136
            %v138 = vld [vmem:[%s26 + $0x1b8] sm:$0xff]
            %139 = vst [vmem:[%s27 + $0x1b8] sm:$0xff] %v138
            %v140 = vld [vmem:[%s26 + $0x1c0] sm:$0xff]
            %141 = vst [vmem:[%s27 + $0x1c0] sm:$0xff] %v140
            %v142 = vld [vmem:[%s26 + $0x1c8] sm:$0xff]
            %143 = vst [vmem:[%s27 + $0x1c8] sm:$0xff] %v142
            %v144 = vld [vmem:[%s26 + $0x1d0] sm:$0xff]
            %145 = vst [vmem:[%s27 + $0x1d0] sm:$0xff] %v144
            %v146 = vld [vmem:[%s26 + $0x1d8] sm:$0xff]
            %147 = vst [vmem:[%s27 + $0x1d8] sm:$0xff] %v146
            %v148 = vld [vmem:[%s26 + $0x1e0] sm:$0xff]
            %149 = vst [vmem:[%s27 + $0x1e0] sm:$0xff] %v148
            %v150 = vld [vmem:[%s26 + $0x1e8] sm:$0xff]
            %151 = vst [vmem:[%s27 + $0x1e8] sm:$0xff] %v150
            %v152 = vld [vmem:[%s26 + $0x1f0] sm:$0xff]
            %153 = vst [vmem:[%s27 + $0x1f0] sm:$0xff] %v152
            %v154 = vld [vmem:[%s26 + $0x1f8] sm:$0xff]
            %155 = vst [vmem:[%s27 + $0x1f8] sm:$0xff] %v154
          $region19: #{custom_lstm_forward.1} parent=13 // loop_footer
            %s25 = sadd.s32 1, %s21
          $region20: #{custom_lstm_forward.1} parent=13 // loop_footer_branch
            %20 = sbr.rel target = $region16
          $region21: #{custom_lstm_forward.1} parent=13 // loop_exit
            _
        $region14: #{custom_lstm_forward.1} parent=10 // pred_fallthru
          _
        // Predicated region
        $region22: #{custom_lstm_forward.1} parent=10 // pred_check
          _
        $region23: #{custom_lstm_forward.1} parent=10 // pred_check_branch
          %157 = sbr.rel target = $region25
        $region24: #{custom_lstm_forward.1} parent=10 // pred_region
          _
        $region25: #{custom_lstm_forward.1} parent=10 // pred_fallthru
          _
        // Predicated region
        $region26: #{custom_lstm_forward.1} parent=10 // pred_check
          _
        $region27: #{custom_lstm_forward.1} parent=10 // pred_check_branch
          %160 = sbr.rel (0) target = $region29
        $region28: #{custom_lstm_forward.1} parent=10 // pred_region
          %161 = vsyncadd [#allocation9], 8192
        $region29: #{custom_lstm_forward.1} parent=10 // pred_fallthru
          _
        %s162 = smul.u32 8, 16
        %s163 = smul.u32 %s162, 4
        %s164 = sshll.u32 %s163, 4
        %165 = dma.done [#allocation9], %s164
      %166 = vst [vmem:[#allocation3] sm:$0x3] 0.0
      %167 = vst [vmem:[#allocation4] sm:$0x3] 0.0
    $region9: #{custom_lstm_forward.1} parent=1 // pred_fallthru
      _
    %v168 = vld [vmem:[#allocation2] sm:$0xff]
    %v169 = vld [vmem:[#allocation2 + $0x8] sm:$0xff]
    %v170 = vld [vmem:[#allocation2 + $0x10] sm:$0xff]
    %v171 = vld [vmem:[#allocation2 + $0x18] sm:$0xff]
    %v172 = vld [vmem:[#allocation2 + $0x20] sm:$0xff]
    %v173 = vld [vmem:[#allocation2 + $0x28] sm:$0xff]
    %v174 = vld [vmem:[#allocation2 + $0x30] sm:$0xff]
    %v175 = vld [vmem:[#allocation2 + $0x38] sm:$0xff]
    %v176 = vld [vmem:[#allocation2 + $0x40] sm:$0xff]
    %v177 = vld [vmem:[#allocation2 + $0x48] sm:$0xff]
    %v178 = vld [vmem:[#allocation2 + $0x50] sm:$0xff]
    %v179 = vld [vmem:[#allocation2 + $0x58] sm:$0xff]
    %v180 = vld [vmem:[#allocation2 + $0x60] sm:$0xff]
    %v181 = vld [vmem:[#allocation2 + $0x68] sm:$0xff]
    %v182 = vld [vmem:[#allocation2 + $0x70] sm:$0xff]
    %v183 = vld [vmem:[#allocation2 + $0x78] sm:$0xff]
    %v184 = vld [vmem:[#allocation2 + $0x80] sm:$0xff]
    %v185 = vld [vmem:[#allocation2 + $0x88] sm:$0xff]
    %v186 = vld [vmem:[#allocation2 + $0x90] sm:$0xff]
    %v187 = vld [vmem:[#allocation2 + $0x98] sm:$0xff]
    %v188 = vld [vmem:[#allocation2 + $0xa0] sm:$0xff]
    %v189 = vld [vmem:[#allocation2 + $0xa8] sm:$0xff]
    %v190 = vld [vmem:[#allocation2 + $0xb0] sm:$0xff]
    %v191 = vld [vmem:[#allocation2 + $0xb8] sm:$0xff]
    %v192 = vld [vmem:[#allocation2 + $0xc0] sm:$0xff]
    %v193 = vld [vmem:[#allocation2 + $0xc8] sm:$0xff]
    %v194 = vld [vmem:[#allocation2 + $0xd0] sm:$0xff]
    %v195 = vld [vmem:[#allocation2 + $0xd8] sm:$0xff]
    %v196 = vld [vmem:[#allocation2 + $0xe0] sm:$0xff]
    %v197 = vld [vmem:[#allocation2 + $0xe8] sm:$0xff]
    %v198 = vld [vmem:[#allocation2 + $0xf0] sm:$0xff]
    %v199 = vld [vmem:[#allocation2 + $0xf8] sm:$0xff]
    %v200 = vld [vmem:[#allocation2 + $0x100] sm:$0xff]
    %v201 = vld [vmem:[#allocation2 + $0x108] sm:$0xff]
    %v202 = vld [vmem:[#allocation2 + $0x110] sm:$0xff]
    %v203 = vld [vmem:[#allocation2 + $0x118] sm:$0xff]
    %v204 = vld [vmem:[#allocation2 + $0x120] sm:$0xff]
    %v205 = vld [vmem:[#allocation2 + $0x128] sm:$0xff]
    %v206 = vld [vmem:[#allocation2 + $0x130] sm:$0xff]
    %v207 = vld [vmem:[#allocation2 + $0x138] sm:$0xff]
    %v208 = vld [vmem:[#allocation2 + $0x140] sm:$0xff]
    %v209 = vld [vmem:[#allocation2 + $0x148] sm:$0xff]
    %v210 = vld [vmem:[#allocation2 + $0x150] sm:$0xff]
    %v211 = vld [vmem:[#allocation2 + $0x158] sm:$0xff]
    %v212 = vld [vmem:[#allocation2 + $0x160] sm:$0xff]
    %v213 = vld [vmem:[#allocation2 + $0x168] sm:$0xff]
    %v214 = vld [vmem:[#allocation2 + $0x170] sm:$0xff]
    %v215 = vld [vmem:[#allocation2 + $0x178] sm:$0xff]
    %v216 = vld [vmem:[#allocation2 + $0x180] sm:$0xff]
    %v217 = vld [vmem:[#allocation2 + $0x188] sm:$0xff]
    %v218 = vld [vmem:[#allocation2 + $0x190] sm:$0xff]
    %v219 = vld [vmem:[#allocation2 + $0x198] sm:$0xff]
    %v220 = vld [vmem:[#allocation2 + $0x1a0] sm:$0xff]
    %v221 = vld [vmem:[#allocation2 + $0x1a8] sm:$0xff]
    %v222 = vld [vmem:[#allocation2 + $0x1b0] sm:$0xff]
    %v223 = vld [vmem:[#allocation2 + $0x1b8] sm:$0xff]
    %v224 = vld [vmem:[#allocation2 + $0x1c0] sm:$0xff]
    %v225 = vld [vmem:[#allocation2 + $0x1c8] sm:$0xff]
    %v226 = vld [vmem:[#allocation2 + $0x1d0] sm:$0xff]
    %v227 = vld [vmem:[#allocation2 + $0x1d8] sm:$0xff]
    %v228 = vld [vmem:[#allocation2 + $0x1e0] sm:$0xff]
    %v229 = vld [vmem:[#allocation2 + $0x1e8] sm:$0xff]
    %v230 = vld [vmem:[#allocation2 + $0x1f0] sm:$0xff]
    %v231 = vld [vmem:[#allocation2 + $0x1f8] sm:$0xff]
    %v232 = vld [vmem:[#allocation3] sm:$0x3]
    %v233 = vld [vmem:[#allocation4] sm:$0x3]
    %v234 = vld [vmem:[%s0] sm:$0xff]
    %235 = vmatpush.msra.mxu0 %v228
    %236 = vmatpush.msra.mxu0 %v224
    %237 = vmatpush.msra.mxu0 %v220
    %238 = vmatpush.msra.mxu0 %v216
    %239 = vmatpush.msra.mxu0 %v212
    %240 = vmatpush.msra.mxu0 %v208
    %241 = vmatpush.msra.mxu0 %v204
    %242 = vmatpush.msra.mxu0 %v200
    %243 = vmatpush.msra.mxu0 %v196
    %244 = vmatpush.msra.mxu0 %v192
    %245 = vmatpush.msra.mxu0 %v188
    %246 = vmatpush.msra.mxu0 %v184
    %247 = vmatpush.msra.mxu0 %v180
    %248 = vmatpush.msra.mxu0 %v176
    %249 = vmatpush.msra.mxu0 %v172
    %250 = vmatpush.msra.mxu0 %v168
    %251 = vmatmul.f32.gmra.mxu0 %v232
    %v252 = vpop.f32.mrf.mxu0
    %v253 = vadd.f32 0.0, %v252
    %254 = vdwg.mxu0
    %255 = vmatpush.msra.mxu0 %v229
    %256 = vmatpush.msra.mxu0 %v225
    %257 = vmatpush.msra.mxu0 %v221
    %258 = vmatpush.msra.mxu0 %v217
    %259 = vmatpush.msra.mxu0 %v213
    %260 = vmatpush.msra.mxu0 %v209
    %261 = vmatpush.msra.mxu0 %v205
    %262 = vmatpush.msra.mxu0 %v201
    %263 = vmatpush.msra.mxu0 %v197
    %264 = vmatpush.msra.mxu0 %v193
    %265 = vmatpush.msra.mxu0 %v189
    %266 = vmatpush.msra.mxu0 %v185
    %267 = vmatpush.msra.mxu0 %v181
    %268 = vmatpush.msra.mxu0 %v177
    %269 = vmatpush.msra.mxu0 %v173
    %270 = vmatpush.msra.mxu0 %v169
    %271 = vmatmul.f32.gmra.mxu0 %v232
    %v272 = vpop.f32.mrf.mxu0
    %v273 = vadd.f32 0.0, %v272
    %274 = vdwg.mxu0
    %275 = vmatpush.msra.mxu0 %v230
    %276 = vmatpush.msra.mxu0 %v226
    %277 = vmatpush.msra.mxu0 %v222
    %278 = vmatpush.msra.mxu0 %v218
    %279 = vmatpush.msra.mxu0 %v214
    %280 = vmatpush.msra.mxu0 %v210
    %281 = vmatpush.msra.mxu0 %v206
    %282 = vmatpush.msra.mxu0 %v202
    %283 = vmatpush.msra.mxu0 %v198
    %284 = vmatpush.msra.mxu0 %v194
    %285 = vmatpush.msra.mxu0 %v190
    %286 = vmatpush.msra.mxu0 %v186
    %287 = vmatpush.msra.mxu0 %v182
    %288 = vmatpush.msra.mxu0 %v178
    %289 = vmatpush.msra.mxu0 %v174
    %290 = vmatpush.msra.mxu0 %v170
    %291 = vmatmul.f32.gmra.mxu0 %v232
    %v292 = vpop.f32.mrf.mxu0
    %v293 = vadd.f32 0.0, %v292
    %294 = vdwg.mxu0
    %295 = vmatpush.msra.mxu0 %v231
    %296 = vmatpush.msra.mxu0 %v227
    %297 = vmatpush.msra.mxu0 %v223
    %298 = vmatpush.msra.mxu0 %v219
    %299 = vmatpush.msra.mxu0 %v215
    %300 = vmatpush.msra.mxu0 %v211
    %301 = vmatpush.msra.mxu0 %v207
    %302 = vmatpush.msra.mxu0 %v203
    %303 = vmatpush.msra.mxu0 %v199
    %304 = vmatpush.msra.mxu0 %v195
    %305 = vmatpush.msra.mxu0 %v191
    %306 = vmatpush.msra.mxu0 %v187
    %307 = vmatpush.msra.mxu0 %v183
    %308 = vmatpush.msra.mxu0 %v179
    %309 = vmatpush.msra.mxu0 %v175
    %310 = vmatpush.msra.mxu0 %v171
    %311 = vmatmul.f32.gmra.mxu0 %v232
    %v312 = vpop.f32.mrf.mxu0
    %v313 = vadd.f32 0.0, %v312
    %314 = vdwg.mxu0
    %v319 = vrot.slane %v273, 6
    %v320 = vrot.slane %v293, 4
    %v321 = vrot.slane %v313, 2
    %vm322 = vcmask 1041408
    %v323 = vsel %vm322, %v253, %v319
    %vm324 = vcmask 1045508
    %v325 = vsel %vm324, %v320, %v321
    %vm326 = vcmask 1043456
    %v327 = vsel %vm326, %v323, %v325
    %v329 = vadd.f32 %v234, %v327
    %v330 = vmul.f32 %v329, 0.5
    %v331 = vtanh.pop %v330
    %v332 = vmul.f32 %v331, 0.5
    %v333 = vadd.f32 %v332, 0.5
    %v335 = vrot.slane %v329, 2
    %v337 = vmul.f32 %v335, 0.5
    %v338 = vtanh.pop %v337
    %v339 = vmul.f32 %v338, 0.5
    %v340 = vadd.f32 %v339, 0.5
    %v341 = vrot.slane %v329, 4
    %v343 = vtanh.pop %v341
    %v344 = vrot.slane %v329, 6
    %v346 = vmul.f32 %v344, 0.5
    %v347 = vtanh.pop %v346
    %v348 = vmul.f32 %v347, 0.5
    %v349 = vadd.f32 %v348, 0.5
    %v350 = vmul.f32 %v340, %v233
    %v351 = vmul.f32 %v333, %v343
    %v352 = vadd.f32 %v350, %v351
    %v353 = vtanh.pop %v352
    %v354 = vmul.f32 %v349, %v353
    %355 = vst [vmem:[%s2] sm:$0x3] %v354
    %s356 = scalar_lea.vmem %s0, 8
    %v357 = vld [vmem:[%s356] sm:$0xff]
    %358 = vmatpush.msra.mxu0 %v228
    %359 = vmatpush.msra.mxu0 %v224
    %360 = vmatpush.msra.mxu0 %v220
    %361 = vmatpush.msra.mxu0 %v216
    %362 = vmatpush.msra.mxu0 %v212
    %363 = vmatpush.msra.mxu0 %v208
    %364 = vmatpush.msra.mxu0 %v204
    %365 = vmatpush.msra.mxu0 %v200
    %366 = vmatpush.msra.mxu0 %v196
    %367 = vmatpush.msra.mxu0 %v192
    %368 = vmatpush.msra.mxu0 %v188
    %369 = vmatpush.msra.mxu0 %v184
    %370 = vmatpush.msra.mxu0 %v180
    %371 = vmatpush.msra.mxu0 %v176
    %372 = vmatpush.msra.mxu0 %v172
    %373 = vmatpush.msra.mxu0 %v168
    %374 = vmatmul.f32.gmra.mxu0 %v354
    %v375 = vpop.f32.mrf.mxu0
    %v376 = vadd.f32 0.0, %v375
    %377 = vdwg.mxu0
    %378 = vmatpush.msra.mxu0 %v229
    %379 = vmatpush.msra.mxu0 %v225
    %380 = vmatpush.msra.mxu0 %v221
    %381 = vmatpush.msra.mxu0 %v217
    %382 = vmatpush.msra.mxu0 %v213
    %383 = vmatpush.msra.mxu0 %v209
    %384 = vmatpush.msra.mxu0 %v205
    %385 = vmatpush.msra.mxu0 %v201
    %386 = vmatpush.msra.mxu0 %v197
    %387 = vmatpush.msra.mxu0 %v193
    %388 = vmatpush.msra.mxu0 %v189
    %389 = vmatpush.msra.mxu0 %v185
    %390 = vmatpush.msra.mxu0 %v181
    %391 = vmatpush.msra.mxu0 %v177
    %392 = vmatpush.msra.mxu0 %v173
    %393 = vmatpush.msra.mxu0 %v169
    %394 = vmatmul.f32.gmra.mxu0 %v354
    %v395 = vpop.f32.mrf.mxu0
    %v396 = vadd.f32 0.0, %v395
    %397 = vdwg.mxu0
    %398 = vmatpush.msra.mxu0 %v230
    %399 = vmatpush.msra.mxu0 %v226
    %400 = vmatpush.msra.mxu0 %v222
    %401 = vmatpush.msra.mxu0 %v218
    %402 = vmatpush.msra.mxu0 %v214
    %403 = vmatpush.msra.mxu0 %v210
    %404 = vmatpush.msra.mxu0 %v206
    %405 = vmatpush.msra.mxu0 %v202
    %406 = vmatpush.msra.mxu0 %v198
    %407 = vmatpush.msra.mxu0 %v194
    %408 = vmatpush.msra.mxu0 %v190
    %409 = vmatpush.msra.mxu0 %v186
    %410 = vmatpush.msra.mxu0 %v182
    %411 = vmatpush.msra.mxu0 %v178
    %412 = vmatpush.msra.mxu0 %v174
    %413 = vmatpush.msra.mxu0 %v170
    %414 = vmatmul.f32.gmra.mxu0 %v354
    %v415 = vpop.f32.mrf.mxu0
    %v416 = vadd.f32 0.0, %v415
    %417 = vdwg.mxu0
    %418 = vmatpush.msra.mxu0 %v231
    %419 = vmatpush.msra.mxu0 %v227
    %420 = vmatpush.msra.mxu0 %v223
    %421 = vmatpush.msra.mxu0 %v219
    %422 = vmatpush.msra.mxu0 %v215
    %423 = vmatpush.msra.mxu0 %v211
    %424 = vmatpush.msra.mxu0 %v207
    %425 = vmatpush.msra.mxu0 %v203
    %426 = vmatpush.msra.mxu0 %v199
    %427 = vmatpush.msra.mxu0 %v195
    %428 = vmatpush.msra.mxu0 %v191
    %429 = vmatpush.msra.mxu0 %v187
    %430 = vmatpush.msra.mxu0 %v183
    %431 = vmatpush.msra.mxu0 %v179
    %432 = vmatpush.msra.mxu0 %v175
    %433 = vmatpush.msra.mxu0 %v171
    %434 = vmatmul.f32.gmra.mxu0 %v354
    %v435 = vpop.f32.mrf.mxu0
    %v436 = vadd.f32 0.0, %v435
    %437 = vdwg.mxu0
    %v442 = vrot.slane %v396, 6
    %v443 = vrot.slane %v416, 4
    %v444 = vrot.slane %v436, 2
    %v445 = vsel %vm322, %v376, %v442
    %v446 = vsel %vm324, %v443, %v444
    %v447 = vsel %vm326, %v445, %v446
    %v449 = vadd.f32 %v357, %v447
    %v450 = vmul.f32 %v449, 0.5
    %v451 = vtanh.pop %v450
    %v452 = vmul.f32 %v451, 0.5
    %v453 = vadd.f32 %v452, 0.5
    %v455 = vrot.slane %v449, 2
    %v457 = vmul.f32 %v455, 0.5
    %v458 = vtanh.pop %v457
    %v459 = vmul.f32 %v458, 0.5
    %v460 = vadd.f32 %v459, 0.5
    %v461 = vrot.slane %v449, 4
    %v463 = vtanh.pop %v461
    %v464 = vrot.slane %v449, 6
    %v466 = vmul.f32 %v464, 0.5
    %v467 = vtanh.pop %v466
    %v468 = vmul.f32 %v467, 0.5
    %v469 = vadd.f32 %v468, 0.5
    %v470 = vmul.f32 %v460, %v352
    %v471 = vmul.f32 %v453, %v463
    %v472 = vadd.f32 %v470, %v471
    %v473 = vtanh.pop %v472
    %v474 = vmul.f32 %v469, %v473
    %s475 = scalar_lea.vmem %s2, 2
    %476 = vst [vmem:[%s475] sm:$0x3] %v474
    %s477 = scalar_lea.vmem %s0, 16
    %v478 = vld [vmem:[%s477] sm:$0xff]
    %479 = vmatpush.msra.mxu0 %v228
    %480 = vmatpush.msra.mxu0 %v224
    %481 = vmatpush.msra.mxu0 %v220
    %482 = vmatpush.msra.mxu0 %v216
    %483 = vmatpush.msra.mxu0 %v212
    %484 = vmatpush.msra.mxu0 %v208
    %485 = vmatpush.msra.mxu0 %v204
    %486 = vmatpush.msra.mxu0 %v200
    %487 = vmatpush.msra.mxu0 %v196
    %488 = vmatpush.msra.mxu0 %v192
    %489 = vmatpush.msra.mxu0 %v188
    %490 = vmatpush.msra.mxu0 %v184
    %491 = vmatpush.msra.mxu0 %v180
    %492 = vmatpush.msra.mxu0 %v176
    %493 = vmatpush.msra.mxu0 %v172
    %494 = vmatpush.msra.mxu0 %v168
    %495 = vmatmul.f32.gmra.mxu0 %v474
    %v496 = vpop.f32.mrf.mxu0
    %v497 = vadd.f32 0.0, %v496
    %498 = vdwg.mxu0
    %499 = vmatpush.msra.mxu0 %v229
    %500 = vmatpush.msra.mxu0 %v225
    %501 = vmatpush.msra.mxu0 %v221
    %502 = vmatpush.msra.mxu0 %v217
    %503 = vmatpush.msra.mxu0 %v213
    %504 = vmatpush.msra.mxu0 %v209
    %505 = vmatpush.msra.mxu0 %v205
    %506 = vmatpush.msra.mxu0 %v201
    %507 = vmatpush.msra.mxu0 %v197
    %508 = vmatpush.msra.mxu0 %v193
    %509 = vmatpush.msra.mxu0 %v189
    %510 = vmatpush.msra.mxu0 %v185
    %511 = vmatpush.msra.mxu0 %v181
    %512 = vmatpush.msra.mxu0 %v177
    %513 = vmatpush.msra.mxu0 %v173
    %514 = vmatpush.msra.mxu0 %v169
    %515 = vmatmul.f32.gmra.mxu0 %v474
    %v516 = vpop.f32.mrf.mxu0
    %v517 = vadd.f32 0.0, %v516
    %518 = vdwg.mxu0
    %519 = vmatpush.msra.mxu0 %v230
    %520 = vmatpush.msra.mxu0 %v226
    %521 = vmatpush.msra.mxu0 %v222
    %522 = vmatpush.msra.mxu0 %v218
    %523 = vmatpush.msra.mxu0 %v214
    %524 = vmatpush.msra.mxu0 %v210
    %525 = vmatpush.msra.mxu0 %v206
    %526 = vmatpush.msra.mxu0 %v202
    %527 = vmatpush.msra.mxu0 %v198
    %528 = vmatpush.msra.mxu0 %v194
    %529 = vmatpush.msra.mxu0 %v190
    %530 = vmatpush.msra.mxu0 %v186
    %531 = vmatpush.msra.mxu0 %v182
    %532 = vmatpush.msra.mxu0 %v178
    %533 = vmatpush.msra.mxu0 %v174
    %534 = vmatpush.msra.mxu0 %v170
    %535 = vmatmul.f32.gmra.mxu0 %v474
    %v536 = vpop.f32.mrf.mxu0
    %v537 = vadd.f32 0.0, %v536
    %538 = vdwg.mxu0
    %539 = vmatpush.msra.mxu0 %v231
    %540 = vmatpush.msra.mxu0 %v227
    %541 = vmatpush.msra.mxu0 %v223
    %542 = vmatpush.msra.mxu0 %v219
    %543 = vmatpush.msra.mxu0 %v215
    %544 = vmatpush.msra.mxu0 %v211
    %545 = vmatpush.msra.mxu0 %v207
    %546 = vmatpush.msra.mxu0 %v203
    %547 = vmatpush.msra.mxu0 %v199
    %548 = vmatpush.msra.mxu0 %v195
    %549 = vmatpush.msra.mxu0 %v191
    %550 = vmatpush.msra.mxu0 %v187
    %551 = vmatpush.msra.mxu0 %v183
    %552 = vmatpush.msra.mxu0 %v179
    %553 = vmatpush.msra.mxu0 %v175
    %554 = vmatpush.msra.mxu0 %v171
    %555 = vmatmul.f32.gmra.mxu0 %v474
    %v556 = vpop.f32.mrf.mxu0
    %v557 = vadd.f32 0.0, %v556
    %558 = vdwg.mxu0
    %v563 = vrot.slane %v517, 6
    %v564 = vrot.slane %v537, 4
    %v565 = vrot.slane %v557, 2
    %v566 = vsel %vm322, %v497, %v563
    %v567 = vsel %vm324, %v564, %v565
    %v568 = vsel %vm326, %v566, %v567
    %v570 = vadd.f32 %v478, %v568
    %v571 = vmul.f32 %v570, 0.5
    %v572 = vtanh.pop %v571
    %v573 = vmul.f32 %v572, 0.5
    %v574 = vadd.f32 %v573, 0.5
    %v576 = vrot.slane %v570, 2
    %v578 = vmul.f32 %v576, 0.5
    %v579 = vtanh.pop %v578
    %v580 = vmul.f32 %v579, 0.5
    %v581 = vadd.f32 %v580, 0.5
    %v582 = vrot.slane %v570, 4
    %v584 = vtanh.pop %v582
    %v585 = vrot.slane %v570, 6
    %v587 = vmul.f32 %v585, 0.5
    %v588 = vtanh.pop %v587
    %v589 = vmul.f32 %v588, 0.5
    %v590 = vadd.f32 %v589, 0.5
    %v591 = vmul.f32 %v581, %v472
    %v592 = vmul.f32 %v574, %v584
    %v593 = vadd.f32 %v591, %v592
    %v594 = vtanh.pop %v593
    %v595 = vmul.f32 %v590, %v594
    %s596 = scalar_lea.vmem %s2, 4
    %597 = vst [vmem:[%s596] sm:$0x3] %v595
    %s598 = scalar_lea.vmem %s0, 24
    %v599 = vld [vmem:[%s598] sm:$0xff]
    %600 = vmatpush.msra.mxu0 %v228
    %601 = vmatpush.msra.mxu0 %v224
    %602 = vmatpush.msra.mxu0 %v220
    %603 = vmatpush.msra.mxu0 %v216
    %604 = vmatpush.msra.mxu0 %v212
    %605 = vmatpush.msra.mxu0 %v208
    %606 = vmatpush.msra.mxu0 %v204
    %607 = vmatpush.msra.mxu0 %v200
    %608 = vmatpush.msra.mxu0 %v196
    %609 = vmatpush.msra.mxu0 %v192
    %610 = vmatpush.msra.mxu0 %v188
    %611 = vmatpush.msra.mxu0 %v184
    %612 = vmatpush.msra.mxu0 %v180
    %613 = vmatpush.msra.mxu0 %v176
    %614 = vmatpush.msra.mxu0 %v172
    %615 = vmatpush.msra.mxu0 %v168
    %616 = vmatmul.f32.gmra.mxu0 %v595
    %v617 = vpop.f32.mrf.mxu0
    %v618 = vadd.f32 0.0, %v617
    %619 = vdwg.mxu0
    %620 = vmatpush.msra.mxu0 %v229
    %621 = vmatpush.msra.mxu0 %v225
    %622 = vmatpush.msra.mxu0 %v221
    %623 = vmatpush.msra.mxu0 %v217
    %624 = vmatpush.msra.mxu0 %v213
    %625 = vmatpush.msra.mxu0 %v209
    %626 = vmatpush.msra.mxu0 %v205
    %627 = vmatpush.msra.mxu0 %v201
    %628 = vmatpush.msra.mxu0 %v197
    %629 = vmatpush.msra.mxu0 %v193
    %630 = vmatpush.msra.mxu0 %v189
    %631 = vmatpush.msra.mxu0 %v185
    %632 = vmatpush.msra.mxu0 %v181
    %633 = vmatpush.msra.mxu0 %v177
    %634 = vmatpush.msra.mxu0 %v173
    %635 = vmatpush.msra.mxu0 %v169
    %636 = vmatmul.f32.gmra.mxu0 %v595
    %v637 = vpop.f32.mrf.mxu0
    %v638 = vadd.f32 0.0, %v637
    %639 = vdwg.mxu0
    %640 = vmatpush.msra.mxu0 %v230
    %641 = vmatpush.msra.mxu0 %v226
    %642 = vmatpush.msra.mxu0 %v222
    %643 = vmatpush.msra.mxu0 %v218
    %644 = vmatpush.msra.mxu0 %v214
    %645 = vmatpush.msra.mxu0 %v210
    %646 = vmatpush.msra.mxu0 %v206
    %647 = vmatpush.msra.mxu0 %v202
    %648 = vmatpush.msra.mxu0 %v198
    %649 = vmatpush.msra.mxu0 %v194
    %650 = vmatpush.msra.mxu0 %v190
    %651 = vmatpush.msra.mxu0 %v186
    %652 = vmatpush.msra.mxu0 %v182
    %653 = vmatpush.msra.mxu0 %v178
    %654 = vmatpush.msra.mxu0 %v174
    %655 = vmatpush.msra.mxu0 %v170
    %656 = vmatmul.f32.gmra.mxu0 %v595
    %v657 = vpop.f32.mrf.mxu0
    %v658 = vadd.f32 0.0, %v657
    %659 = vdwg.mxu0
    %660 = vmatpush.msra.mxu0 %v231
    %661 = vmatpush.msra.mxu0 %v227
    %662 = vmatpush.msra.mxu0 %v223
    %663 = vmatpush.msra.mxu0 %v219
    %664 = vmatpush.msra.mxu0 %v215
    %665 = vmatpush.msra.mxu0 %v211
    %666 = vmatpush.msra.mxu0 %v207
    %667 = vmatpush.msra.mxu0 %v203
    %668 = vmatpush.msra.mxu0 %v199
    %669 = vmatpush.msra.mxu0 %v195
    %670 = vmatpush.msra.mxu0 %v191
    %671 = vmatpush.msra.mxu0 %v187
    %672 = vmatpush.msra.mxu0 %v183
    %673 = vmatpush.msra.mxu0 %v179
    %674 = vmatpush.msra.mxu0 %v175
    %675 = vmatpush.msra.mxu0 %v171
    %676 = vmatmul.f32.gmra.mxu0 %v595
    %v677 = vpop.f32.mrf.mxu0
    %v678 = vadd.f32 0.0, %v677
    %679 = vdwg.mxu0
    %v684 = vrot.slane %v638, 6
    %v685 = vrot.slane %v658, 4
    %v686 = vrot.slane %v678, 2
    %v687 = vsel %vm322, %v618, %v684
    %v688 = vsel %vm324, %v685, %v686
    %v689 = vsel %vm326, %v687, %v688
    %v691 = vadd.f32 %v599, %v689
    %v692 = vmul.f32 %v691, 0.5
    %v693 = vtanh.pop %v692
    %v694 = vmul.f32 %v693, 0.5
    %v695 = vadd.f32 %v694, 0.5
    %v697 = vrot.slane %v691, 2
    %v699 = vmul.f32 %v697, 0.5
    %v700 = vtanh.pop %v699
    %v701 = vmul.f32 %v700, 0.5
    %v702 = vadd.f32 %v701, 0.5
    %v703 = vrot.slane %v691, 4
    %v705 = vtanh.pop %v703
    %v706 = vrot.slane %v691, 6
    %v708 = vmul.f32 %v706, 0.5
    %v709 = vtanh.pop %v708
    %v710 = vmul.f32 %v709, 0.5
    %v711 = vadd.f32 %v710, 0.5
    %v712 = vmul.f32 %v702, %v593
    %v713 = vmul.f32 %v695, %v705
    %v714 = vadd.f32 %v712, %v713
    %v715 = vtanh.pop %v714
    %v716 = vmul.f32 %v711, %v715
    %s717 = scalar_lea.vmem %s2, 6
    %718 = vst [vmem:[%s717] sm:$0x3] %v716
    %s719 = scalar_lea.vmem %s0, 32
    %v720 = vld [vmem:[%s719] sm:$0xff]
    %721 = vmatpush.msra.mxu0 %v228
    %722 = vmatpush.msra.mxu0 %v224
    %723 = vmatpush.msra.mxu0 %v220
    %724 = vmatpush.msra.mxu0 %v216
    %725 = vmatpush.msra.mxu0 %v212
    %726 = vmatpush.msra.mxu0 %v208
    %727 = vmatpush.msra.mxu0 %v204
    %728 = vmatpush.msra.mxu0 %v200
    %729 = vmatpush.msra.mxu0 %v196
    %730 = vmatpush.msra.mxu0 %v192
    %731 = vmatpush.msra.mxu0 %v188
    %732 = vmatpush.msra.mxu0 %v184
    %733 = vmatpush.msra.mxu0 %v180
    %734 = vmatpush.msra.mxu0 %v176
    %735 = vmatpush.msra.mxu0 %v172
    %736 = vmatpush.msra.mxu0 %v168
    %737 = vmatmul.f32.gmra.mxu0 %v716
    %v738 = vpop.f32.mrf.mxu0
    %v739 = vadd.f32 0.0, %v738
    %740 = vdwg.mxu0
    %741 = vmatpush.msra.mxu0 %v229
    %742 = vmatpush.msra.mxu0 %v225
    %743 = vmatpush.msra.mxu0 %v221
    %744 = vmatpush.msra.mxu0 %v217
    %745 = vmatpush.msra.mxu0 %v213
    %746 = vmatpush.msra.mxu0 %v209
    %747 = vmatpush.msra.mxu0 %v205
    %748 = vmatpush.msra.mxu0 %v201
    %749 = vmatpush.msra.mxu0 %v197
    %750 = vmatpush.msra.mxu0 %v193
    %751 = vmatpush.msra.mxu0 %v189
    %752 = vmatpush.msra.mxu0 %v185
    %753 = vmatpush.msra.mxu0 %v181
    %754 = vmatpush.msra.mxu0 %v177
    %755 = vmatpush.msra.mxu0 %v173
    %756 = vmatpush.msra.mxu0 %v169
    %757 = vmatmul.f32.gmra.mxu0 %v716
    %v758 = vpop.f32.mrf.mxu0
    %v759 = vadd.f32 0.0, %v758
    %760 = vdwg.mxu0
    %761 = vmatpush.msra.mxu0 %v230
    %762 = vmatpush.msra.mxu0 %v226
    %763 = vmatpush.msra.mxu0 %v222
    %764 = vmatpush.msra.mxu0 %v218
    %765 = vmatpush.msra.mxu0 %v214
    %766 = vmatpush.msra.mxu0 %v210
    %767 = vmatpush.msra.mxu0 %v206
    %768 = vmatpush.msra.mxu0 %v202
    %769 = vmatpush.msra.mxu0 %v198
    %770 = vmatpush.msra.mxu0 %v194
    %771 = vmatpush.msra.mxu0 %v190
    %772 = vmatpush.msra.mxu0 %v186
    %773 = vmatpush.msra.mxu0 %v182
    %774 = vmatpush.msra.mxu0 %v178
    %775 = vmatpush.msra.mxu0 %v174
    %776 = vmatpush.msra.mxu0 %v170
    %777 = vmatmul.f32.gmra.mxu0 %v716
    %v778 = vpop.f32.mrf.mxu0
    %v779 = vadd.f32 0.0, %v778
    %780 = vdwg.mxu0
    %781 = vmatpush.msra.mxu0 %v231
    %782 = vmatpush.msra.mxu0 %v227
    %783 = vmatpush.msra.mxu0 %v223
    %784 = vmatpush.msra.mxu0 %v219
    %785 = vmatpush.msra.mxu0 %v215
    %786 = vmatpush.msra.mxu0 %v211
    %787 = vmatpush.msra.mxu0 %v207
    %788 = vmatpush.msra.mxu0 %v203
    %789 = vmatpush.msra.mxu0 %v199
    %790 = vmatpush.msra.mxu0 %v195
    %791 = vmatpush.msra.mxu0 %v191
    %792 = vmatpush.msra.mxu0 %v187
    %793 = vmatpush.msra.mxu0 %v183
    %794 = vmatpush.msra.mxu0 %v179
    %795 = vmatpush.msra.mxu0 %v175
    %796 = vmatpush.msra.mxu0 %v171
    %797 = vmatmul.f32.gmra.mxu0 %v716
    %v798 = vpop.f32.mrf.mxu0
    %v799 = vadd.f32 0.0, %v798
    %800 = vdwg.mxu0
    %v805 = vrot.slane %v759, 6
    %v806 = vrot.slane %v779, 4
    %v807 = vrot.slane %v799, 2
    %v808 = vsel %vm322, %v739, %v805
    %v809 = vsel %vm324, %v806, %v807
    %v810 = vsel %vm326, %v808, %v809
    %v812 = vadd.f32 %v720, %v810
    %v813 = vmul.f32 %v812, 0.5
    %v814 = vtanh.pop %v813
    %v815 = vmul.f32 %v814, 0.5
    %v816 = vadd.f32 %v815, 0.5
    %v818 = vrot.slane %v812, 2
    %v820 = vmul.f32 %v818, 0.5
    %v821 = vtanh.pop %v820
    %v822 = vmul.f32 %v821, 0.5
    %v823 = vadd.f32 %v822, 0.5
    %v824 = vrot.slane %v812, 4
    %v826 = vtanh.pop %v824
    %v827 = vrot.slane %v812, 6
    %v829 = vmul.f32 %v827, 0.5
    %v830 = vtanh.pop %v829
    %v831 = vmul.f32 %v830, 0.5
    %v832 = vadd.f32 %v831, 0.5
    %v833 = vmul.f32 %v823, %v714
    %v834 = vmul.f32 %v816, %v826
    %v835 = vadd.f32 %v833, %v834
    %v836 = vtanh.pop %v835
    %v837 = vmul.f32 %v832, %v836
    %s838 = scalar_lea.vmem %s2, 8
    %839 = vst [vmem:[%s838] sm:$0x3] %v837
    %s840 = scalar_lea.vmem %s0, 40
    %v841 = vld [vmem:[%s840] sm:$0xff]
    %842 = vmatpush.msra.mxu0 %v228
    %843 = vmatpush.msra.mxu0 %v224
    %844 = vmatpush.msra.mxu0 %v220
    %845 = vmatpush.msra.mxu0 %v216
    %846 = vmatpush.msra.mxu0 %v212
    %847 = vmatpush.msra.mxu0 %v208
    %848 = vmatpush.msra.mxu0 %v204
    %849 = vmatpush.msra.mxu0 %v200
    %850 = vmatpush.msra.mxu0 %v196
    %851 = vmatpush.msra.mxu0 %v192
    %852 = vmatpush.msra.mxu0 %v188
    %853 = vmatpush.msra.mxu0 %v184
    %854 = vmatpush.msra.mxu0 %v180
    %855 = vmatpush.msra.mxu0 %v176
    %856 = vmatpush.msra.mxu0 %v172
    %857 = vmatpush.msra.mxu0 %v168
    %858 = vmatmul.f32.gmra.mxu0 %v837
    %v859 = vpop.f32.mrf.mxu0
    %v860 = vadd.f32 0.0, %v859
    %861 = vdwg.mxu0
    %862 = vmatpush.msra.mxu0 %v229
    %863 = vmatpush.msra.mxu0 %v225
    %864 = vmatpush.msra.mxu0 %v221
    %865 = vmatpush.msra.mxu0 %v217
    %866 = vmatpush.msra.mxu0 %v213
    %867 = vmatpush.msra.mxu0 %v209
    %868 = vmatpush.msra.mxu0 %v205
    %869 = vmatpush.msra.mxu0 %v201
    %870 = vmatpush.msra.mxu0 %v197
    %871 = vmatpush.msra.mxu0 %v193
    %872 = vmatpush.msra.mxu0 %v189
    %873 = vmatpush.msra.mxu0 %v185
    %874 = vmatpush.msra.mxu0 %v181
    %875 = vmatpush.msra.mxu0 %v177
    %876 = vmatpush.msra.mxu0 %v173
    %877 = vmatpush.msra.mxu0 %v169
    %878 = vmatmul.f32.gmra.mxu0 %v837
    %v879 = vpop.f32.mrf.mxu0
    %v880 = vadd.f32 0.0, %v879
    %881 = vdwg.mxu0
    %882 = vmatpush.msra.mxu0 %v230
    %883 = vmatpush.msra.mxu0 %v226
    %884 = vmatpush.msra.mxu0 %v222
    %885 = vmatpush.msra.mxu0 %v218
    %886 = vmatpush.msra.mxu0 %v214
    %887 = vmatpush.msra.mxu0 %v210
    %888 = vmatpush.msra.mxu0 %v206
    %889 = vmatpush.msra.mxu0 %v202
    %890 = vmatpush.msra.mxu0 %v198
    %891 = vmatpush.msra.mxu0 %v194
    %892 = vmatpush.msra.mxu0 %v190
    %893 = vmatpush.msra.mxu0 %v186
    %894 = vmatpush.msra.mxu0 %v182
    %895 = vmatpush.msra.mxu0 %v178
    %896 = vmatpush.msra.mxu0 %v174
    %897 = vmatpush.msra.mxu0 %v170
    %898 = vmatmul.f32.gmra.mxu0 %v837
    %v899 = vpop.f32.mrf.mxu0
    %v900 = vadd.f32 0.0, %v899
    %901 = vdwg.mxu0
    %902 = vmatpush.msra.mxu0 %v231
    %903 = vmatpush.msra.mxu0 %v227
    %904 = vmatpush.msra.mxu0 %v223
    %905 = vmatpush.msra.mxu0 %v219
    %906 = vmatpush.msra.mxu0 %v215
    %907 = vmatpush.msra.mxu0 %v211
    %908 = vmatpush.msra.mxu0 %v207
    %909 = vmatpush.msra.mxu0 %v203
    %910 = vmatpush.msra.mxu0 %v199
    %911 = vmatpush.msra.mxu0 %v195
    %912 = vmatpush.msra.mxu0 %v191
    %913 = vmatpush.msra.mxu0 %v187
    %914 = vmatpush.msra.mxu0 %v183
    %915 = vmatpush.msra.mxu0 %v179
    %916 = vmatpush.msra.mxu0 %v175
    %917 = vmatpush.msra.mxu0 %v171
    %918 = vmatmul.f32.gmra.mxu0 %v837
    %v919 = vpop.f32.mrf.mxu0
    %v920 = vadd.f32 0.0, %v919
    %921 = vdwg.mxu0
    %v926 = vrot.slane %v880, 6
    %v927 = vrot.slane %v900, 4
    %v928 = vrot.slane %v920, 2
    %v929 = vsel %vm322, %v860, %v926
    %v930 = vsel %vm324, %v927, %v928
    %v931 = vsel %vm326, %v929, %v930
    %v933 = vadd.f32 %v841, %v931
    %v934 = vmul.f32 %v933, 0.5
    %v935 = vtanh.pop %v934
    %v936 = vmul.f32 %v935, 0.5
    %v937 = vadd.f32 %v936, 0.5
    %v939 = vrot.slane %v933, 2
    %v941 = vmul.f32 %v939, 0.5
    %v942 = vtanh.pop %v941
    %v943 = vmul.f32 %v942, 0.5
    %v944 = vadd.f32 %v943, 0.5
    %v945 = vrot.slane %v933, 4
    %v947 = vtanh.pop %v945
    %v948 = vrot.slane %v933, 6
    %v950 = vmul.f32 %v948, 0.5
    %v951 = vtanh.pop %v950
    %v952 = vmul.f32 %v951, 0.5
    %v953 = vadd.f32 %v952, 0.5
    %v954 = vmul.f32 %v944, %v835
    %v955 = vmul.f32 %v937, %v947
    %v956 = vadd.f32 %v954, %v955
    %v957 = vtanh.pop %v956
    %v958 = vmul.f32 %v953, %v957
    %s959 = scalar_lea.vmem %s2, 10
    %960 = vst [vmem:[%s959] sm:$0x3] %v958
    %s961 = scalar_lea.vmem %s0, 48
    %v962 = vld [vmem:[%s961] sm:$0xff]
    %963 = vmatpush.msra.mxu0 %v228
    %964 = vmatpush.msra.mxu0 %v224
    %965 = vmatpush.msra.mxu0 %v220
    %966 = vmatpush.msra.mxu0 %v216
    %967 = vmatpush.msra.mxu0 %v212
    %968 = vmatpush.msra.mxu0 %v208
    %969 = vmatpush.msra.mxu0 %v204
    %970 = vmatpush.msra.mxu0 %v200
    %971 = vmatpush.msra.mxu0 %v196
    %972 = vmatpush.msra.mxu0 %v192
    %973 = vmatpush.msra.mxu0 %v188
    %974 = vmatpush.msra.mxu0 %v184
    %975 = vmatpush.msra.mxu0 %v180
    %976 = vmatpush.msra.mxu0 %v176
    %977 = vmatpush.msra.mxu0 %v172
    %978 = vmatpush.msra.mxu0 %v168
    %979 = vmatmul.f32.gmra.mxu0 %v958
    %v980 = vpop.f32.mrf.mxu0
    %v981 = vadd.f32 0.0, %v980
    %982 = vdwg.mxu0
    %983 = vmatpush.msra.mxu0 %v229
    %984 = vmatpush.msra.mxu0 %v225
    %985 = vmatpush.msra.mxu0 %v221
    %986 = vmatpush.msra.mxu0 %v217
    %987 = vmatpush.msra.mxu0 %v213
    %988 = vmatpush.msra.mxu0 %v209
    %989 = vmatpush.msra.mxu0 %v205
    %990 = vmatpush.msra.mxu0 %v201
    %991 = vmatpush.msra.mxu0 %v197
    %992 = vmatpush.msra.mxu0 %v193
    %993 = vmatpush.msra.mxu0 %v189
    %994 = vmatpush.msra.mxu0 %v185
    %995 = vmatpush.msra.mxu0 %v181
    %996 = vmatpush.msra.mxu0 %v177
    %997 = vmatpush.msra.mxu0 %v173
    %998 = vmatpush.msra.mxu0 %v169
    %999 = vmatmul.f32.gmra.mxu0 %v958
    %v1000 = vpop.f32.mrf.mxu0
    %v1001 = vadd.f32 0.0, %v1000
    %1002 = vdwg.mxu0
    %1003 = vmatpush.msra.mxu0 %v230
    %1004 = vmatpush.msra.mxu0 %v226
    %1005 = vmatpush.msra.mxu0 %v222
    %1006 = vmatpush.msra.mxu0 %v218
    %1007 = vmatpush.msra.mxu0 %v214
    %1008 = vmatpush.msra.mxu0 %v210
    %1009 = vmatpush.msra.mxu0 %v206
    %1010 = vmatpush.msra.mxu0 %v202
    %1011 = vmatpush.msra.mxu0 %v198
    %1012 = vmatpush.msra.mxu0 %v194
    %1013 = vmatpush.msra.mxu0 %v190
    %1014 = vmatpush.msra.mxu0 %v186
    %1015 = vmatpush.msra.mxu0 %v182
    %1016 = vmatpush.msra.mxu0 %v178
    %1017 = vmatpush.msra.mxu0 %v174
    %1018 = vmatpush.msra.mxu0 %v170
    %1019 = vmatmul.f32.gmra.mxu0 %v958
    %v1020 = vpop.f32.mrf.mxu0
    %v1021 = vadd.f32 0.0, %v1020
    %1022 = vdwg.mxu0
    %1023 = vmatpush.msra.mxu0 %v231
    %1024 = vmatpush.msra.mxu0 %v227
    %1025 = vmatpush.msra.mxu0 %v223
    %1026 = vmatpush.msra.mxu0 %v219
    %1027 = vmatpush.msra.mxu0 %v215
    %1028 = vmatpush.msra.mxu0 %v211
    %1029 = vmatpush.msra.mxu0 %v207
    %1030 = vmatpush.msra.mxu0 %v203
    %1031 = vmatpush.msra.mxu0 %v199
    %1032 = vmatpush.msra.mxu0 %v195
    %1033 = vmatpush.msra.mxu0 %v191
    %1034 = vmatpush.msra.mxu0 %v187
    %1035 = vmatpush.msra.mxu0 %v183
    %1036 = vmatpush.msra.mxu0 %v179
    %1037 = vmatpush.msra.mxu0 %v175
    %1038 = vmatpush.msra.mxu0 %v171
    %1039 = vmatmul.f32.gmra.mxu0 %v958
    %v1040 = vpop.f32.mrf.mxu0
    %v1041 = vadd.f32 0.0, %v1040
    %1042 = vdwg.mxu0
    %v1047 = vrot.slane %v1001, 6
    %v1048 = vrot.slane %v1021, 4
    %v1049 = vrot.slane %v1041, 2
    %v1050 = vsel %vm322, %v981, %v1047
    %v1051 = vsel %vm324, %v1048, %v1049
    %v1052 = vsel %vm326, %v1050, %v1051
    %v1054 = vadd.f32 %v962, %v1052
    %v1055 = vmul.f32 %v1054, 0.5
    %v1056 = vtanh.pop %v1055
    %v1057 = vmul.f32 %v1056, 0.5
    %v1058 = vadd.f32 %v1057, 0.5
    %v1060 = vrot.slane %v1054, 2
    %v1062 = vmul.f32 %v1060, 0.5
    %v1063 = vtanh.pop %v1062
    %v1064 = vmul.f32 %v1063, 0.5
    %v1065 = vadd.f32 %v1064, 0.5
    %v1066 = vrot.slane %v1054, 4
    %v1068 = vtanh.pop %v1066
    %v1069 = vrot.slane %v1054, 6
    %v1071 = vmul.f32 %v1069, 0.5
    %v1072 = vtanh.pop %v1071
    %v1073 = vmul.f32 %v1072, 0.5
    %v1074 = vadd.f32 %v1073, 0.5
    %v1075 = vmul.f32 %v1065, %v956
    %v1076 = vmul.f32 %v1058, %v1068
    %v1077 = vadd.f32 %v1075, %v1076
    %v1078 = vtanh.pop %v1077
    %v1079 = vmul.f32 %v1074, %v1078
    %s1080 = scalar_lea.vmem %s2, 12
    %1081 = vst [vmem:[%s1080] sm:$0x3] %v1079
    %s1082 = scalar_lea.vmem %s0, 56
    %v1083 = vld [vmem:[%s1082] sm:$0xff]
    %1084 = vmatpush.msra.mxu0 %v228
    %1085 = vmatpush.msra.mxu0 %v224
    %1086 = vmatpush.msra.mxu0 %v220
    %1087 = vmatpush.msra.mxu0 %v216
    %1088 = vmatpush.msra.mxu0 %v212
    %1089 = vmatpush.msra.mxu0 %v208
    %1090 = vmatpush.msra.mxu0 %v204
    %1091 = vmatpush.msra.mxu0 %v200
    %1092 = vmatpush.msra.mxu0 %v196
    %1093 = vmatpush.msra.mxu0 %v192
    %1094 = vmatpush.msra.mxu0 %v188
    %1095 = vmatpush.msra.mxu0 %v184
    %1096 = vmatpush.msra.mxu0 %v180
    %1097 = vmatpush.msra.mxu0 %v176
    %1098 = vmatpush.msra.mxu0 %v172
    %1099 = vmatpush.msra.mxu0 %v168
    %1100 = vmatmul.f32.gmra.mxu0 %v1079
    %v1101 = vpop.f32.mrf.mxu0
    %v1102 = vadd.f32 0.0, %v1101
    %1103 = vdwg.mxu0
    %1104 = vmatpush.msra.mxu0 %v229
    %1105 = vmatpush.msra.mxu0 %v225
    %1106 = vmatpush.msra.mxu0 %v221
    %1107 = vmatpush.msra.mxu0 %v217
    %1108 = vmatpush.msra.mxu0 %v213
    %1109 = vmatpush.msra.mxu0 %v209
    %1110 = vmatpush.msra.mxu0 %v205
    %1111 = vmatpush.msra.mxu0 %v201
    %1112 = vmatpush.msra.mxu0 %v197
    %1113 = vmatpush.msra.mxu0 %v193
    %1114 = vmatpush.msra.mxu0 %v189
    %1115 = vmatpush.msra.mxu0 %v185
    %1116 = vmatpush.msra.mxu0 %v181
    %1117 = vmatpush.msra.mxu0 %v177
    %1118 = vmatpush.msra.mxu0 %v173
    %1119 = vmatpush.msra.mxu0 %v169
    %1120 = vmatmul.f32.gmra.mxu0 %v1079
    %v1121 = vpop.f32.mrf.mxu0
    %v1122 = vadd.f32 0.0, %v1121
    %1123 = vdwg.mxu0
    %1124 = vmatpush.msra.mxu0 %v230
    %1125 = vmatpush.msra.mxu0 %v226
    %1126 = vmatpush.msra.mxu0 %v222
    %1127 = vmatpush.msra.mxu0 %v218
    %1128 = vmatpush.msra.mxu0 %v214
    %1129 = vmatpush.msra.mxu0 %v210
    %1130 = vmatpush.msra.mxu0 %v206
    %1131 = vmatpush.msra.mxu0 %v202
    %1132 = vmatpush.msra.mxu0 %v198
    %1133 = vmatpush.msra.mxu0 %v194
    %1134 = vmatpush.msra.mxu0 %v190
    %1135 = vmatpush.msra.mxu0 %v186
    %1136 = vmatpush.msra.mxu0 %v182
    %1137 = vmatpush.msra.mxu0 %v178
    %1138 = vmatpush.msra.mxu0 %v174
    %1139 = vmatpush.msra.mxu0 %v170
    %1140 = vmatmul.f32.gmra.mxu0 %v1079
    %v1141 = vpop.f32.mrf.mxu0
    %v1142 = vadd.f32 0.0, %v1141
    %1143 = vdwg.mxu0
    %1144 = vmatpush.msra.mxu0 %v231
    %1145 = vmatpush.msra.mxu0 %v227
    %1146 = vmatpush.msra.mxu0 %v223
    %1147 = vmatpush.msra.mxu0 %v219
    %1148 = vmatpush.msra.mxu0 %v215
    %1149 = vmatpush.msra.mxu0 %v211
    %1150 = vmatpush.msra.mxu0 %v207
    %1151 = vmatpush.msra.mxu0 %v203
    %1152 = vmatpush.msra.mxu0 %v199
    %1153 = vmatpush.msra.mxu0 %v195
    %1154 = vmatpush.msra.mxu0 %v191
    %1155 = vmatpush.msra.mxu0 %v187
    %1156 = vmatpush.msra.mxu0 %v183
    %1157 = vmatpush.msra.mxu0 %v179
    %1158 = vmatpush.msra.mxu0 %v175
    %1159 = vmatpush.msra.mxu0 %v171
    %1160 = vmatmul.f32.gmra.mxu0 %v1079
    %v1161 = vpop.f32.mrf.mxu0
    %v1162 = vadd.f32 0.0, %v1161
    %1163 = vdwg.mxu0
    %v1168 = vrot.slane %v1122, 6
    %v1169 = vrot.slane %v1142, 4
    %v1170 = vrot.slane %v1162, 2
    %v1171 = vsel %vm322, %v1102, %v1168
    %v1172 = vsel %vm324, %v1169, %v1170
    %v1173 = vsel %vm326, %v1171, %v1172
    %v1175 = vadd.f32 %v1083, %v1173
    %v1176 = vmul.f32 %v1175, 0.5
    %v1177 = vtanh.pop %v1176
    %v1178 = vmul.f32 %v1177, 0.5
    %v1179 = vadd.f32 %v1178, 0.5
    %v1181 = vrot.slane %v1175, 2
    %v1183 = vmul.f32 %v1181, 0.5
    %v1184 = vtanh.pop %v1183
    %v1185 = vmul.f32 %v1184, 0.5
    %v1186 = vadd.f32 %v1185, 0.5
    %v1187 = vrot.slane %v1175, 4
    %v1189 = vtanh.pop %v1187
    %v1190 = vrot.slane %v1175, 6
    %v1192 = vmul.f32 %v1190, 0.5
    %v1193 = vtanh.pop %v1192
    %v1194 = vmul.f32 %v1193, 0.5
    %v1195 = vadd.f32 %v1194, 0.5
    %v1196 = vmul.f32 %v1186, %v1077
    %v1197 = vmul.f32 %v1179, %v1189
    %v1198 = vadd.f32 %v1196, %v1197
    %v1199 = vtanh.pop %v1198
    %v1200 = vmul.f32 %v1195, %v1199
    %s1201 = scalar_lea.vmem %s2, 14
    %1202 = vst [vmem:[%s1201] sm:$0x3] %v1200
    %1203 = vst [vmem:[#allocation3] sm:$0x3] %v1200
    %1204 = vst [vmem:[#allocation4] sm:$0x3] %v1198
    %1205 = vst [vmem:[#allocation5] sm:$0x3] %v1200
    %1206 = vst [vmem:[#allocation7] sm:$0x3] %v1198
    // Predicated region
    $region30: #{custom_lstm_forward.1} parent=1 // pred_check
      _
    $region31: #{custom_lstm_forward.1} parent=1 // pred_check_branch
      %1208 = sbr.rel (0) target = $region33
    $region32: #{custom_lstm_forward.1} parent=1 // pred_region
      _
    $region33: #{custom_lstm_forward.1} parent=1 // pred_fallthru
      _
    // Predicated region
    $region34: #{custom_lstm_forward.1} parent=1 // pred_check
      _
    $region35: #{custom_lstm_forward.1} parent=1 // pred_check_branch
      %1210 = sbr.rel (0) target = $region37
    $region36: #{custom_lstm_forward.1} parent=1 // pred_region
      %1212 = vsyncadd [#allocation6], 0
      %s1214 = sshll.u32 [#allocation5], 4
      %s1215 = int_to_ptr.vmem [resolvable:$true] %s1214
      %s1216 = sshll.u32 %s3, 4
      %s1217 = int_to_ptr.hbm [resolvable:$true] %s1216
      %1219 = dma.vmem_to_hbm [thread:$0]  %s1215, 32, %s1217, [#allocation6]
    $region37: #{custom_lstm_forward.1} parent=1 // pred_fallthru
      _
    // Predicated region
    $region38: #{custom_lstm_forward.1} parent=1 // pred_check
      _
    $region39: #{custom_lstm_forward.1} parent=1 // pred_check_branch
      %1221 = sbr.rel (0) target = $region41
    $region40: #{custom_lstm_forward.1} parent=1 // pred_region
      %1223 = vsyncadd [#allocation8], 0
      %s1225 = sshll.u32 [#allocation7], 4
      %s1226 = int_to_ptr.vmem [resolvable:$true] %s1225
      %s1227 = sshll.u32 %s4, 4
      %s1228 = int_to_ptr.hbm [resolvable:$true] %s1227
      %1230 = dma.vmem_to_hbm [thread:$0]  %s1226, 32, %s1228, [#allocation8]
    $region41: #{custom_lstm_forward.1} parent=1 // pred_fallthru
      _
    // Predicated region
    $region42: #{custom_lstm_forward.1} parent=1 // pred_check
      _
    $region43: #{custom_lstm_forward.1} parent=1 // pred_check_branch
      %1232 = sbr.rel (0) target = $region45
    $region44: #{custom_lstm_forward.1} parent=1 // pred_region
      _
    $region45: #{custom_lstm_forward.1} parent=1 // pred_fallthru
      _
    // Predicated region
    $region46: #{custom_lstm_forward.1} parent=1 // pred_check
      _
    $region47: #{custom_lstm_forward.1} parent=1 // pred_check_branch
      %1234 = sbr.rel (0) target = $region49
    $region48: #{custom_lstm_forward.1} parent=1 // pred_region
      %1236 = dma.done [#allocation6], 32
    $region49: #{custom_lstm_forward.1} parent=1 // pred_fallthru
      _
    // Predicated region
    $region50: #{custom_lstm_forward.1} parent=1 // pred_check
      _
    $region51: #{custom_lstm_forward.1} parent=1 // pred_check_branch
      %1238 = sbr.rel (0) target = $region53
    $region52: #{custom_lstm_forward.1} parent=1 // pred_region
      %1240 = dma.done [#allocation8], 32
    $region53: #{custom_lstm_forward.1} parent=1 // pred_fallthru
      _
    %1241 = vsyncpa [#allocation6], 1
    %1242 = vsyncpa [#allocation8], 1

</llo_original>
